<compile_context>
chip_gen: v7x
topology: tpu7x:2x2x1
jax: 0.10.0
libtpu: 0.0.40
codegen_flags: <defaults>
</compile_context>

<pallas_src>
import functools

import jax
import jax.numpy as jnp
from jax import lax
from jax.experimental import pallas as pl
from jax.experimental.pallas import tpu as pltpu


def _round_up(v, m):
    return (v + m - 1) // m * m


def _pick_time_chunk(seq_len, max_chunk):
    """Largest legal time chunk: either the whole sequence, or a multiple of 8
    (required for the x BlockSpec sublane tiling) that divides seq_len."""
    if seq_len <= max_chunk:
        return seq_len
    best = None
    for c in range(8, max_chunk + 1, 8):
        if seq_len % c == 0:
            best = c
    # TODO(synk): if no multiple-of-8 divisor exists the whole sequence stays
    # resident; pad T in the wrapper for very long ragged sequences instead.
    return best if best is not None else seq_len


def _lstm_fused_kernel(x_ref, wih_ref, whh_ref, b_ref, wout_ref, bout_ref,
                       out_ref, gx_scr, h_scr, c_scr, *,
                       time_chunk, hidden_size, unroll):
    H = hidden_size
    tt = time_chunk

    # Zero initial state (matches the module's _init_hidden) on the first chunk.
    @pl.when(pl.program_id(0) == 0)
    def _init():
        h_scr[...] = jnp.zeros_like(h_scr)
        c_scr[...] = jnp.zeros_like(c_scr)

    # ---- per-chunk input projection: gx[t] = x[:, t] @ W_ih^T + (b_ih+b_hh) ----
    # Static Python loop -> static slices of the (B_pad, tt, I) x chunk; writes
    # the time-major gate slab into VMEM scratch (never touches HBM).
    wih = wih_ref[...]                      # (I, 4H) bf16, tiny
    bias = b_ref[...]                       # (1, 4H) f32
    for t in range(tt):
        xt = x_ref[:, t, :].astype(wih.dtype)
        gx_scr[t] = jnp.dot(xt, wih, preferred_element_type=jnp.float32) + bias

    # ---- recurrence over the chunk: one MXU push per step, state in vregs ----
    def step(t, carry):
        h, c = carry
        gates = gx_scr[t] + jnp.dot(h.astype(whh_ref.dtype), whh_ref[...],
                                    preferred_element_type=jnp.float32)
        # PyTorch gate order (i, f, g, o): sigmoid on i/f/o, tanh only on g.
        i_f = jax.nn.sigmoid(gates[:, 0:2 * H])
        g_g = jnp.tanh(gates[:, 2 * H:3 * H])
        o_g = jax.nn.sigmoid(gates[:, 3 * H:4 * H])
        c_new = i_f[:, H:2 * H] * c + i_f[:, 0:H] * g_g
        h_new = o_g * jnp.tanh(c_new)
        return h_new, c_new

    h, c = lax.fori_loop(0, tt, step, (h_scr[...], c_scr[...]), unroll=unroll)
    h_scr[...] = h
    c_scr[...] = c

    # ---- fused final Linear on the last hidden state (lane-padded output) ----
    @pl.when(pl.program_id(0) == pl.num_programs(0) - 1)
    def _final():
        out_ref[...] = (jnp.dot(h.astype(wout_ref.dtype), wout_ref[...],
                                preferred_element_type=jnp.float32)
                        + bout_ref[...]).astype(out_ref.dtype)


def lstm_model_forward(x, params, *, time_chunk=32, mxu_dtype=jnp.bfloat16):
    """x: (B, T, I) batch-first, like the PyTorch module. Returns (B, O)."""
    B, T, I = x.shape
    wih_t = params["wih_t"]      # (I, 4H)
    whh_t = params["whh_t"]      # (H, 4H)
    b = params["b"]              # (1, 4H)  == b_ih + b_hh
    wout_t = params["wout_t"]    # (H, O)
    bout = params["bout"]        # (1, O)
    H = whh_t.shape[0]
    G = 4 * H
    O = wout_t.shape[1]

    B_pad = _round_up(B, 8)              # full sublane tile -> unmasked ops
    O_pad = _round_up(O, 128)            # lane-dense unmasked output store
    tt = _pick_time_chunk(T, time_chunk)
    n_chunks = T // tt

    x_pad = jnp.pad(x.astype(jnp.float32), ((0, B_pad - B), (0, 0), (0, 0)))

    # bf16 MXU operands; biases / accumulation / gate math stay f32.
    wih = wih_t.astype(mxu_dtype)
    whh = whh_t.astype(mxu_dtype)
    wout_p = jnp.pad(wout_t, ((0, 0), (0, O_pad - O))).astype(mxu_dtype)
    bout_p = jnp.pad(bout, ((0, 0), (0, O_pad - O)))

    kernel = functools.partial(_lstm_fused_kernel,
                               time_chunk=tt, hidden_size=H,
                               unroll=min(tt, 8))

    out_p = pl.pallas_call(
        kernel,
        out_shape=jax.ShapeDtypeStruct((B_pad, O_pad), jnp.float32),
        grid_spec=pltpu.PrefetchScalarGridSpec(
            num_scalar_prefetch=0,
            grid=(n_chunks,),
            in_specs=[
                pl.BlockSpec((B_pad, tt, I), lambda k: (0, k, 0)),   # x chunk
                pl.BlockSpec((I, G), lambda k: (0, 0)),              # W_ih^T
                pl.BlockSpec((H, G), lambda k: (0, 0)),              # W_hh^T
                pl.BlockSpec((1, G), lambda k: (0, 0)),              # b_ih+b_hh
                pl.BlockSpec((H, O_pad), lambda k: (0, 0)),          # W_out^T
                pl.BlockSpec((1, O_pad), lambda k: (0, 0)),          # b_out
            ],
            out_specs=pl.BlockSpec((B_pad, O_pad), lambda k: (0, 0)),
            scratch_shapes=[
                pltpu.VMEM((tt, B_pad, G), jnp.float32),   # per-chunk gate slab
                pltpu.VMEM((B_pad, H), jnp.float32),       # h carry
                pltpu.VMEM((B_pad, H), jnp.float32),       # c carry
            ],
        ),
        compiler_params=pltpu.CompilerParams(
            dimension_semantics=("arbitrary",)),
    )(x_pad, wih, whh, b, wout_p, bout_p)

    return out_p[:B, :O]


def init_params(key, input_size, hidden_size, output_size):
    """Deterministic init matching PyTorch LSTM/Linear parameter shapes."""
    k = 1.0 / jnp.sqrt(hidden_size)
    keys = jax.random.split(key, 6)
    w_ih = jax.random.uniform(keys[0], (4 * hidden_size, input_size),
                              jnp.float32, -k, k)
    w_hh = jax.random.uniform(keys[1], (4 * hidden_size, hidden_size),
                              jnp.float32, -k, k)
    b_ih = jax.random.uniform(keys[2], (4 * hidden_size,), jnp.float32, -k, k)
    b_hh = jax.random.uniform(keys[3], (4 * hidden_size,), jnp.float32, -k, k)
    w_out = jax.random.uniform(keys[4], (output_size, hidden_size),
                               jnp.float32, -k, k)
    b_out = jax.random.uniform(keys[5], (output_size,), jnp.float32, -k, k)
    return {
        "wih_t": w_ih.T,                               # (I, 4H)
        "whh_t": w_hh.T,                               # (H, 4H)
        "b": (b_ih + b_hh).reshape(1, -1),             # (1, 4H)
        "wout_t": w_out.T,                             # (H, O)
        "bout": b_out.reshape(1, -1),                  # (1, O)
    }


def lstm_model_ref(x, params):
    """Pure-JAX f32 reference (lax.scan) with identical semantics."""
    B = x.shape[0]
    H = params["whh_t"].shape[0]
    x_tbi = jnp.transpose(x, (1, 0, 2)).astype(jnp.float32)

    def step(carry, x_t):
        h, c = carry
        gates = x_t @ params["wih_t"] + h @ params["whh_t"] + params["b"]
        i_g, f_g, g_g, o_g = jnp.split(gates, 4, axis=-1)
        i_g = jax.nn.sigmoid(i_g)
        f_g = jax.nn.sigmoid(f_g)
        g_g = jnp.tanh(g_g)
        o_g = jax.nn.sigmoid(o_g)
        c = f_g * c + i_g * g_g
        h = o_g * jnp.tanh(c)
        return (h, c), None

    h0 = jnp.zeros((B, H), jnp.float32)
    (h_last, _), _ = jax.lax.scan(step, (h0, h0), x_tbi)
    return h_last @ params["wout_t"] + params["bout"]


if __name__ == "__main__":
    # Small shapes consistent with the module (seq-to-vector LSTM).
    # T=16 with time_chunk=8 exercises the multi-chunk scratch-carried state.
    B, T, I, H, O = 2, 16, 4, 32, 24

    key = jax.random.PRNGKey(0)
    k_x, k_p = jax.random.split(key)
    x = jax.random.normal(k_x, (B, T, I), dtype=jnp.float32)
    params = init_params(k_p, I, H, O)

    out = lstm_model_forward(x, params, time_chunk=8)
    out = jax.block_until_ready(out)

    ref = lstm_model_ref(x, params)
    assert out.shape == (B, O)
    # Tolerance loosened vs. pure-f32 because MXU operands are bf16
    # (accumulation and all gate math stay f32).
    assert jnp.allclose(out, ref, atol=2e-2, rtol=2e-2), "mismatch vs reference"

    print("KERNEL_OK")
</pallas_src>

<mosaic_0001>
module attributes {stable_mosaic.version = 11 : i64} {
  func.func @_lstm_fused_kernel(%arg0: i32, %arg1: memref<8x8x4xf32, #tpu.memory_space<vmem>>, %arg2: memref<4x128xbf16, #tpu.memory_space<vmem>>, %arg3: memref<32x128xbf16, #tpu.memory_space<vmem>>, %arg4: memref<1x128xf32, #tpu.memory_space<vmem>>, %arg5: memref<32x128xbf16, #tpu.memory_space<vmem>>, %arg6: memref<1x128xf32, #tpu.memory_space<vmem>>, %arg7: memref<8x128xf32, #tpu.memory_space<vmem>>, %arg8: memref<8x8x128xf32, #tpu.memory_space<vmem>>, %arg9: memref<8x32xf32, #tpu.memory_space<vmem>>, %arg10: memref<8x32xf32, #tpu.memory_space<vmem>>) attributes {dimension_semantics = [#tpu.dimension_semantics<arbitrary>], iteration_bounds = array<i64: 2>, scalar_prefetch = 0 : i64, scratch_operands = 3 : i64, tpu.core_type = #tpu.core_type<tc>, window_params = [{transform_indices = @transform_0, window_bounds = array<i64: 8, 8, 4>}, {pipeline_mode = #tpu.pipeline_mode<synchronous>, transform_indices = @transform_1, window_bounds = array<i64: 4, 128>}, {pipeline_mode = #tpu.pipeline_mode<synchronous>, transform_indices = @transform_2, window_bounds = array<i64: 32, 128>}, {pipeline_mode = #tpu.pipeline_mode<synchronous>, transform_indices = @transform_3, window_bounds = array<i64: 1, 128>}, {pipeline_mode = #tpu.pipeline_mode<synchronous>, transform_indices = @transform_4, window_bounds = array<i64: 32, 128>}, {pipeline_mode = #tpu.pipeline_mode<synchronous>, transform_indices = @transform_5, window_bounds = array<i64: 1, 128>}, {pipeline_mode = #tpu.pipeline_mode<synchronous>, transform_indices = @transform_6, window_bounds = array<i64: 8, 128>}]} {
    %c0_i32 = arith.constant 0 : i32
    %0 = arith.cmpi eq, %arg0, %c0_i32 : i32
    %1 = arith.extui %0 : i1 to i32
    %c0_i32_0 = arith.constant 0 : i32
    %2 = arith.cmpi ne, %1, %c0_i32_0 : i32
    scf.if %2 {
      %cst_119 = arith.constant 0.000000e+00 : f32
      %308 = vector.broadcast %cst_119 : f32 to vector<8x32xf32>
      %c0_120 = arith.constant 0 : index
      %c0_121 = arith.constant 0 : index
      %309 = vector.load %arg9[%c0_120, %c0_121] : memref<8x32xf32, #tpu.memory_space<vmem>>, vector<8x32xf32>
      tpu.vector_store %arg9[%c0_120, %c0_121], %308 {strides = array<i32>} : memref<8x32xf32, #tpu.memory_space<vmem>>, vector<8x32xf32>,
      %cst_122 = arith.constant 0.000000e+00 : f32
      %310 = vector.broadcast %cst_122 : f32 to vector<8x32xf32>
      %c0_123 = arith.constant 0 : index
      %c0_124 = arith.constant 0 : index
      %311 = vector.load %arg10[%c0_123, %c0_124] : memref<8x32xf32, #tpu.memory_space<vmem>>, vector<8x32xf32>
      tpu.vector_store %arg10[%c0_123, %c0_124], %310 {strides = array<i32>} : memref<8x32xf32, #tpu.memory_space<vmem>>, vector<8x32xf32>,
    } else {
    }
    %c0 = arith.constant 0 : index
    %c0_1 = arith.constant 0 : index
    %3 = vector.load %arg2[%c0, %c0_1] : memref<4x128xbf16, #tpu.memory_space<vmem>>, vector<4x128xbf16>
    %c0_2 = arith.constant 0 : index
    %c0_3 = arith.constant 0 : index
    %4 = vector.load %arg4[%c0_2, %c0_3] : memref<1x128xf32, #tpu.memory_space<vmem>>, vector<1x128xf32>
    %c0_4 = arith.constant 0 : index
    %c0_5 = arith.constant 0 : index
    %c0_6 = arith.constant 0 : index
    %5 = vector.load %arg1[%c0_4, %c0_5, %c0_6] : memref<8x8x4xf32, #tpu.memory_space<vmem>>, vector<8x1x4xf32>
    %6 = vector.shape_cast %5 : vector<8x1x4xf32> to vector<8x4xf32>
    %7 = arith.truncf %6 : vector<8x4xf32> to vector<8x4xbf16>
    %cst = arith.constant dense<0.000000e+00> : vector<8x128xf32>
    %8 = tpu.matmul %7, %3, %cst {dimension_numbers = #tpu.dot_dimension_numbers<[1], [0], [0], [1], [0, 0, 1, 1], [], []>} : vector<8x4xbf16>, vector<4x128xbf16>, vector<8x128xf32> -> vector<8x128xf32>
    %9 = vector.broadcast %4 : vector<1x128xf32> to vector<8x128xf32>
    %10 = arith.addf %8, %9 : vector<8x128xf32>
    %c0_7 = arith.constant 0 : index
    %c0_8 = arith.constant 0 : index
    %c0_9 = arith.constant 0 : index
    %11 = vector.load %arg8[%c0_7, %c0_8, %c0_9] : memref<8x8x128xf32, #tpu.memory_space<vmem>>, vector<1x8x128xf32>
    %12 = vector.shape_cast %11 : vector<1x8x128xf32> to vector<8x128xf32>
    %13 = vector.shape_cast %10 : vector<8x128xf32> to vector<1x8x128xf32>
    tpu.vector_store %arg8[%c0_7, %c0_8, %c0_9], %13 {strides = array<i32>} : memref<8x8x128xf32, #tpu.memory_space<vmem>>, vector<1x8x128xf32>,
    %c0_10 = arith.constant 0 : index
    %c1 = arith.constant 1 : index
    %c0_11 = arith.constant 0 : index
    %14 = vector.load %arg1[%c0_10, %c1, %c0_11] : memref<8x8x4xf32, #tpu.memory_space<vmem>>, vector<8x1x4xf32>
    %15 = vector.shape_cast %14 : vector<8x1x4xf32> to vector<8x4xf32>
    %16 = arith.truncf %15 : vector<8x4xf32> to vector<8x4xbf16>
    %cst_12 = arith.constant dense<0.000000e+00> : vector<8x128xf32>
    %17 = tpu.matmul %16, %3, %cst_12 {dimension_numbers = #tpu.dot_dimension_numbers<[1], [0], [0], [1], [0, 0, 1, 1], [], []>} : vector<8x4xbf16>, vector<4x128xbf16>, vector<8x128xf32> -> vector<8x128xf32>
    %18 = vector.broadcast %4 : vector<1x128xf32> to vector<8x128xf32>
    %19 = arith.addf %17, %18 : vector<8x128xf32>
    %c1_13 = arith.constant 1 : index
    %c0_14 = arith.constant 0 : index
    %c0_15 = arith.constant 0 : index
    %20 = vector.load %arg8[%c1_13, %c0_14, %c0_15] : memref<8x8x128xf32, #tpu.memory_space<vmem>>, vector<1x8x128xf32>
    %21 = vector.shape_cast %20 : vector<1x8x128xf32> to vector<8x128xf32>
    %22 = vector.shape_cast %19 : vector<8x128xf32> to vector<1x8x128xf32>
    tpu.vector_store %arg8[%c1_13, %c0_14, %c0_15], %22 {strides = array<i32>} : memref<8x8x128xf32, #tpu.memory_space<vmem>>, vector<1x8x128xf32>,
    %c0_16 = arith.constant 0 : index
    %c2 = arith.constant 2 : index
    %c0_17 = arith.constant 0 : index
    %23 = vector.load %arg1[%c0_16, %c2, %c0_17] : memref<8x8x4xf32, #tpu.memory_space<vmem>>, vector<8x1x4xf32>
    %24 = vector.shape_cast %23 : vector<8x1x4xf32> to vector<8x4xf32>
    %25 = arith.truncf %24 : vector<8x4xf32> to vector<8x4xbf16>
    %cst_18 = arith.constant dense<0.000000e+00> : vector<8x128xf32>
    %26 = tpu.matmul %25, %3, %cst_18 {dimension_numbers = #tpu.dot_dimension_numbers<[1], [0], [0], [1], [0, 0, 1, 1], [], []>} : vector<8x4xbf16>, vector<4x128xbf16>, vector<8x128xf32> -> vector<8x128xf32>
    %27 = vector.broadcast %4 : vector<1x128xf32> to vector<8x128xf32>
    %28 = arith.addf %26, %27 : vector<8x128xf32>
    %c2_19 = arith.constant 2 : index
    %c0_20 = arith.constant 0 : index
    %c0_21 = arith.constant 0 : index
    %29 = vector.load %arg8[%c2_19, %c0_20, %c0_21] : memref<8x8x128xf32, #tpu.memory_space<vmem>>, vector<1x8x128xf32>
    %30 = vector.shape_cast %29 : vector<1x8x128xf32> to vector<8x128xf32>
    %31 = vector.shape_cast %28 : vector<8x128xf32> to vector<1x8x128xf32>
    tpu.vector_store %arg8[%c2_19, %c0_20, %c0_21], %31 {strides = array<i32>} : memref<8x8x128xf32, #tpu.memory_space<vmem>>, vector<1x8x128xf32>,
    %c0_22 = arith.constant 0 : index
    %c3 = arith.constant 3 : index
    %c0_23 = arith.constant 0 : index
    %32 = vector.load %arg1[%c0_22, %c3, %c0_23] : memref<8x8x4xf32, #tpu.memory_space<vmem>>, vector<8x1x4xf32>
    %33 = vector.shape_cast %32 : vector<8x1x4xf32> to vector<8x4xf32>
    %34 = arith.truncf %33 : vector<8x4xf32> to vector<8x4xbf16>
    %cst_24 = arith.constant dense<0.000000e+00> : vector<8x128xf32>
    %35 = tpu.matmul %34, %3, %cst_24 {dimension_numbers = #tpu.dot_dimension_numbers<[1], [0], [0], [1], [0, 0, 1, 1], [], []>} : vector<8x4xbf16>, vector<4x128xbf16>, vector<8x128xf32> -> vector<8x128xf32>
    %36 = vector.broadcast %4 : vector<1x128xf32> to vector<8x128xf32>
    %37 = arith.addf %35, %36 : vector<8x128xf32>
    %c3_25 = arith.constant 3 : index
    %c0_26 = arith.constant 0 : index
    %c0_27 = arith.constant 0 : index
    %38 = vector.load %arg8[%c3_25, %c0_26, %c0_27] : memref<8x8x128xf32, #tpu.memory_space<vmem>>, vector<1x8x128xf32>
    %39 = vector.shape_cast %38 : vector<1x8x128xf32> to vector<8x128xf32>
    %40 = vector.shape_cast %37 : vector<8x128xf32> to vector<1x8x128xf32>
    tpu.vector_store %arg8[%c3_25, %c0_26, %c0_27], %40 {strides = array<i32>} : memref<8x8x128xf32, #tpu.memory_space<vmem>>, vector<1x8x128xf32>,
    %c0_28 = arith.constant 0 : index
    %c4 = arith.constant 4 : index
    %c0_29 = arith.constant 0 : index
    %41 = vector.load %arg1[%c0_28, %c4, %c0_29] : memref<8x8x4xf32, #tpu.memory_space<vmem>>, vector<8x1x4xf32>
    %42 = vector.shape_cast %41 : vector<8x1x4xf32> to vector<8x4xf32>
    %43 = arith.truncf %42 : vector<8x4xf32> to vector<8x4xbf16>
    %cst_30 = arith.constant dense<0.000000e+00> : vector<8x128xf32>
    %44 = tpu.matmul %43, %3, %cst_30 {dimension_numbers = #tpu.dot_dimension_numbers<[1], [0], [0], [1], [0, 0, 1, 1], [], []>} : vector<8x4xbf16>, vector<4x128xbf16>, vector<8x128xf32> -> vector<8x128xf32>
    %45 = vector.broadcast %4 : vector<1x128xf32> to vector<8x128xf32>
    %46 = arith.addf %44, %45 : vector<8x128xf32>
    %c4_31 = arith.constant 4 : index
    %c0_32 = arith.constant 0 : index
    %c0_33 = arith.constant 0 : index
    %47 = vector.load %arg8[%c4_31, %c0_32, %c0_33] : memref<8x8x128xf32, #tpu.memory_space<vmem>>, vector<1x8x128xf32>
    %48 = vector.shape_cast %47 : vector<1x8x128xf32> to vector<8x128xf32>
    %49 = vector.shape_cast %46 : vector<8x128xf32> to vector<1x8x128xf32>
    tpu.vector_store %arg8[%c4_31, %c0_32, %c0_33], %49 {strides = array<i32>} : memref<8x8x128xf32, #tpu.memory_space<vmem>>, vector<1x8x128xf32>,
    %c0_34 = arith.constant 0 : index
    %c5 = arith.constant 5 : index
    %c0_35 = arith.constant 0 : index
    %50 = vector.load %arg1[%c0_34, %c5, %c0_35] : memref<8x8x4xf32, #tpu.memory_space<vmem>>, vector<8x1x4xf32>
    %51 = vector.shape_cast %50 : vector<8x1x4xf32> to vector<8x4xf32>
    %52 = arith.truncf %51 : vector<8x4xf32> to vector<8x4xbf16>
    %cst_36 = arith.constant dense<0.000000e+00> : vector<8x128xf32>
    %53 = tpu.matmul %52, %3, %cst_36 {dimension_numbers = #tpu.dot_dimension_numbers<[1], [0], [0], [1], [0, 0, 1, 1], [], []>} : vector<8x4xbf16>, vector<4x128xbf16>, vector<8x128xf32> -> vector<8x128xf32>
    %54 = vector.broadcast %4 : vector<1x128xf32> to vector<8x128xf32>
    %55 = arith.addf %53, %54 : vector<8x128xf32>
    %c5_37 = arith.constant 5 : index
    %c0_38 = arith.constant 0 : index
    %c0_39 = arith.constant 0 : index
    %56 = vector.load %arg8[%c5_37, %c0_38, %c0_39] : memref<8x8x128xf32, #tpu.memory_space<vmem>>, vector<1x8x128xf32>
    %57 = vector.shape_cast %56 : vector<1x8x128xf32> to vector<8x128xf32>
    %58 = vector.shape_cast %55 : vector<8x128xf32> to vector<1x8x128xf32>
    tpu.vector_store %arg8[%c5_37, %c0_38, %c0_39], %58 {strides = array<i32>} : memref<8x8x128xf32, #tpu.memory_space<vmem>>, vector<1x8x128xf32>,
    %c0_40 = arith.constant 0 : index
    %c6 = arith.constant 6 : index
    %c0_41 = arith.constant 0 : index
    %59 = vector.load %arg1[%c0_40, %c6, %c0_41] : memref<8x8x4xf32, #tpu.memory_space<vmem>>, vector<8x1x4xf32>
    %60 = vector.shape_cast %59 : vector<8x1x4xf32> to vector<8x4xf32>
    %61 = arith.truncf %60 : vector<8x4xf32> to vector<8x4xbf16>
    %cst_42 = arith.constant dense<0.000000e+00> : vector<8x128xf32>
    %62 = tpu.matmul %61, %3, %cst_42 {dimension_numbers = #tpu.dot_dimension_numbers<[1], [0], [0], [1], [0, 0, 1, 1], [], []>} : vector<8x4xbf16>, vector<4x128xbf16>, vector<8x128xf32> -> vector<8x128xf32>
    %63 = vector.broadcast %4 : vector<1x128xf32> to vector<8x128xf32>
    %64 = arith.addf %62, %63 : vector<8x128xf32>
    %c6_43 = arith.constant 6 : index
    %c0_44 = arith.constant 0 : index
    %c0_45 = arith.constant 0 : index
    %65 = vector.load %arg8[%c6_43, %c0_44, %c0_45] : memref<8x8x128xf32, #tpu.memory_space<vmem>>, vector<1x8x128xf32>
    %66 = vector.shape_cast %65 : vector<1x8x128xf32> to vector<8x128xf32>
    %67 = vector.shape_cast %64 : vector<8x128xf32> to vector<1x8x128xf32>
    tpu.vector_store %arg8[%c6_43, %c0_44, %c0_45], %67 {strides = array<i32>} : memref<8x8x128xf32, #tpu.memory_space<vmem>>, vector<1x8x128xf32>,
    %c0_46 = arith.constant 0 : index
    %c7 = arith.constant 7 : index
    %c0_47 = arith.constant 0 : index
    %68 = vector.load %arg1[%c0_46, %c7, %c0_47] : memref<8x8x4xf32, #tpu.memory_space<vmem>>, vector<8x1x4xf32>
    %69 = vector.shape_cast %68 : vector<8x1x4xf32> to vector<8x4xf32>
    %70 = arith.truncf %69 : vector<8x4xf32> to vector<8x4xbf16>
    %cst_48 = arith.constant dense<0.000000e+00> : vector<8x128xf32>
    %71 = tpu.matmul %70, %3, %cst_48 {dimension_numbers = #tpu.dot_dimension_numbers<[1], [0], [0], [1], [0, 0, 1, 1], [], []>} : vector<8x4xbf16>, vector<4x128xbf16>, vector<8x128xf32> -> vector<8x128xf32>
    %72 = vector.broadcast %4 : vector<1x128xf32> to vector<8x128xf32>
    %73 = arith.addf %71, %72 : vector<8x128xf32>
    %c7_49 = arith.constant 7 : index
    %c0_50 = arith.constant 0 : index
    %c0_51 = arith.constant 0 : index
    %74 = vector.load %arg8[%c7_49, %c0_50, %c0_51] : memref<8x8x128xf32, #tpu.memory_space<vmem>>, vector<1x8x128xf32>
    %75 = vector.shape_cast %74 : vector<1x8x128xf32> to vector<8x128xf32>
    %76 = vector.shape_cast %73 : vector<8x128xf32> to vector<1x8x128xf32>
    tpu.vector_store %arg8[%c7_49, %c0_50, %c0_51], %76 {strides = array<i32>} : memref<8x8x128xf32, #tpu.memory_space<vmem>>, vector<1x8x128xf32>,
    %c0_52 = arith.constant 0 : index
    %c0_53 = arith.constant 0 : index
    %77 = vector.load %arg9[%c0_52, %c0_53] : memref<8x32xf32, #tpu.memory_space<vmem>>, vector<8x32xf32>
    %c0_54 = arith.constant 0 : index
    %c0_55 = arith.constant 0 : index
    %78 = vector.load %arg10[%c0_54, %c0_55] : memref<8x32xf32, #tpu.memory_space<vmem>>, vector<8x32xf32>
    %c0_i32_56 = arith.constant 0 : i32
    %79 = arith.index_cast %c0_i32_56 : i32 to index
    %c0_57 = arith.constant 0 : index
    %c0_58 = arith.constant 0 : index
    %80 = vector.load %arg8[%79, %c0_57, %c0_58] : memref<8x8x128xf32, #tpu.memory_space<vmem>>, vector<1x8x128xf32>
    %81 = vector.shape_cast %80 : vector<1x8x128xf32> to vector<8x128xf32>
    %82 = arith.truncf %77 : vector<8x32xf32> to vector<8x32xbf16>
    %c0_59 = arith.constant 0 : index
    %c0_60 = arith.constant 0 : index
    %83 = vector.load %arg3[%c0_59, %c0_60] : memref<32x128xbf16, #tpu.memory_space<vmem>>, vector<32x128xbf16>
    %cst_61 = arith.constant dense<0.000000e+00> : vector<8x128xf32>
    %84 = tpu.matmul %82, %83, %cst_61 {dimension_numbers = #tpu.dot_dimension_numbers<[1], [0], [0], [1], [0, 0, 1, 1], [], []>} : vector<8x32xbf16>, vector<32x128xbf16>, vector<8x128xf32> -> vector<8x128xf32>
    %85 = arith.addf %81, %84 : vector<8x128xf32>
    %86 = vector.extract_strided_slice %85 {offsets = [0, 0], sizes = [8, 64], strides = [1, 1]} : vector<8x128xf32> to vector<8x64xf32>
    %87 = arith.negf %86 : vector<8x64xf32>
    %88 = math.exp %87 : vector<8x64xf32>
    %cst_62 = arith.constant 1.000000e+00 : f32
    %89 = vector.broadcast %cst_62 : f32 to vector<8x64xf32>
    %90 = arith.addf %89, %88 : vector<8x64xf32>
    %91 = arith.divf %89, %90 : vector<8x64xf32>
    %92 = vector.extract_strided_slice %85 {offsets = [0, 64], sizes = [8, 32], strides = [1, 1]} : vector<8x128xf32> to vector<8x32xf32>
    %93 = math.tanh %92 : vector<8x32xf32>
    %94 = vector.extract_strided_slice %85 {offsets = [0, 96], sizes = [8, 32], strides = [1, 1]} : vector<8x128xf32> to vector<8x32xf32>
    %95 = arith.negf %94 : vector<8x32xf32>
    %96 = math.exp %95 : vector<8x32xf32>
    %cst_63 = arith.constant 1.000000e+00 : f32
    %97 = vector.broadcast %cst_63 : f32 to vector<8x32xf32>
    %98 = arith.addf %97, %96 : vector<8x32xf32>
    %99 = arith.divf %97, %98 : vector<8x32xf32>
    %100 = vector.extract_strided_slice %91 {offsets = [0, 32], sizes = [8, 32], strides = [1, 1]} : vector<8x64xf32> to vector<8x32xf32>
    %101 = arith.mulf %100, %78 : vector<8x32xf32>
    %102 = vector.extract_strided_slice %91 {offsets = [0, 0], sizes = [8, 32], strides = [1, 1]} : vector<8x64xf32> to vector<8x32xf32>
    %103 = arith.mulf %102, %93 : vector<8x32xf32>
    %104 = arith.addf %101, %103 : vector<8x32xf32>
    %105 = math.tanh %104 : vector<8x32xf32>
    %106 = arith.mulf %99, %105 : vector<8x32xf32>
    %c1_i32 = arith.constant 1 : i32
    %107 = arith.index_cast %c1_i32 : i32 to index
    %c0_64 = arith.constant 0 : index
    %c0_65 = arith.constant 0 : index
    %108 = vector.load %arg8[%107, %c0_64, %c0_65] : memref<8x8x128xf32, #tpu.memory_space<vmem>>, vector<1x8x128xf32>
    %109 = vector.shape_cast %108 : vector<1x8x128xf32> to vector<8x128xf32>
    %110 = arith.truncf %106 : vector<8x32xf32> to vector<8x32xbf16>
    %c0_66 = arith.constant 0 : index
    %c0_67 = arith.constant 0 : index
    %111 = vector.load %arg3[%c0_66, %c0_67] : memref<32x128xbf16, #tpu.memory_space<vmem>>, vector<32x128xbf16>
    %cst_68 = arith.constant dense<0.000000e+00> : vector<8x128xf32>
    %112 = tpu.matmul %110, %111, %cst_68 {dimension_numbers = #tpu.dot_dimension_numbers<[1], [0], [0], [1], [0, 0, 1, 1], [], []>} : vector<8x32xbf16>, vector<32x128xbf16>, vector<8x128xf32> -> vector<8x128xf32>
    %113 = arith.addf %109, %112 : vector<8x128xf32>
    %114 = vector.extract_strided_slice %113 {offsets = [0, 0], sizes = [8, 64], strides = [1, 1]} : vector<8x128xf32> to vector<8x64xf32>
    %115 = arith.negf %114 : vector<8x64xf32>
    %116 = math.exp %115 : vector<8x64xf32>
    %cst_69 = arith.constant 1.000000e+00 : f32
    %117 = vector.broadcast %cst_69 : f32 to vector<8x64xf32>
    %118 = arith.addf %117, %116 : vector<8x64xf32>
    %119 = arith.divf %117, %118 : vector<8x64xf32>
    %120 = vector.extract_strided_slice %113 {offsets = [0, 64], sizes = [8, 32], strides = [1, 1]} : vector<8x128xf32> to vector<8x32xf32>
    %121 = math.tanh %120 : vector<8x32xf32>
    %122 = vector.extract_strided_slice %113 {offsets = [0, 96], sizes = [8, 32], strides = [1, 1]} : vector<8x128xf32> to vector<8x32xf32>
    %123 = arith.negf %122 : vector<8x32xf32>
    %124 = math.exp %123 : vector<8x32xf32>
    %cst_70 = arith.constant 1.000000e+00 : f32
    %125 = vector.broadcast %cst_70 : f32 to vector<8x32xf32>
    %126 = arith.addf %125, %124 : vector<8x32xf32>
    %127 = arith.divf %125, %126 : vector<8x32xf32>
    %128 = vector.extract_strided_slice %119 {offsets = [0, 32], sizes = [8, 32], strides = [1, 1]} : vector<8x64xf32> to vector<8x32xf32>
    %129 = arith.mulf %128, %104 : vector<8x32xf32>
    %130 = vector.extract_strided_slice %119 {offsets = [0, 0], sizes = [8, 32], strides = [1, 1]} : vector<8x64xf32> to vector<8x32xf32>
    %131 = arith.mulf %130, %121 : vector<8x32xf32>
    %132 = arith.addf %129, %131 : vector<8x32xf32>
    %133 = math.tanh %132 : vector<8x32xf32>
    %134 = arith.mulf %127, %133 : vector<8x32xf32>
    %c2_i32 = arith.constant 2 : i32
    %135 = arith.index_cast %c2_i32 : i32 to index
    %c0_71 = arith.constant 0 : index
    %c0_72 = arith.constant 0 : index
    %136 = vector.load %arg8[%135, %c0_71, %c0_72] : memref<8x8x128xf32, #tpu.memory_space<vmem>>, vector<1x8x128xf32>
    %137 = vector.shape_cast %136 : vector<1x8x128xf32> to vector<8x128xf32>
    %138 = arith.truncf %134 : vector<8x32xf32> to vector<8x32xbf16>
    %c0_73 = arith.constant 0 : index
    %c0_74 = arith.constant 0 : index
    %139 = vector.load %arg3[%c0_73, %c0_74] : memref<32x128xbf16, #tpu.memory_space<vmem>>, vector<32x128xbf16>
    %cst_75 = arith.constant dense<0.000000e+00> : vector<8x128xf32>
    %140 = tpu.matmul %138, %139, %cst_75 {dimension_numbers = #tpu.dot_dimension_numbers<[1], [0], [0], [1], [0, 0, 1, 1], [], []>} : vector<8x32xbf16>, vector<32x128xbf16>, vector<8x128xf32> -> vector<8x128xf32>
    %141 = arith.addf %137, %140 : vector<8x128xf32>
    %142 = vector.extract_strided_slice %141 {offsets = [0, 0], sizes = [8, 64], strides = [1, 1]} : vector<8x128xf32> to vector<8x64xf32>
    %143 = arith.negf %142 : vector<8x64xf32>
    %144 = math.exp %143 : vector<8x64xf32>
    %cst_76 = arith.constant 1.000000e+00 : f32
    %145 = vector.broadcast %cst_76 : f32 to vector<8x64xf32>
    %146 = arith.addf %145, %144 : vector<8x64xf32>
    %147 = arith.divf %145, %146 : vector<8x64xf32>
    %148 = vector.extract_strided_slice %141 {offsets = [0, 64], sizes = [8, 32], strides = [1, 1]} : vector<8x128xf32> to vector<8x32xf32>
    %149 = math.tanh %148 : vector<8x32xf32>
    %150 = vector.extract_strided_slice %141 {offsets = [0, 96], sizes = [8, 32], strides = [1, 1]} : vector<8x128xf32> to vector<8x32xf32>
    %151 = arith.negf %150 : vector<8x32xf32>
    %152 = math.exp %151 : vector<8x32xf32>
    %cst_77 = arith.constant 1.000000e+00 : f32
    %153 = vector.broadcast %cst_77 : f32 to vector<8x32xf32>
    %154 = arith.addf %153, %152 : vector<8x32xf32>
    %155 = arith.divf %153, %154 : vector<8x32xf32>
    %156 = vector.extract_strided_slice %147 {offsets = [0, 32], sizes = [8, 32], strides = [1, 1]} : vector<8x64xf32> to vector<8x32xf32>
    %157 = arith.mulf %156, %132 : vector<8x32xf32>
    %158 = vector.extract_strided_slice %147 {offsets = [0, 0], sizes = [8, 32], strides = [1, 1]} : vector<8x64xf32> to vector<8x32xf32>
    %159 = arith.mulf %158, %149 : vector<8x32xf32>
    %160 = arith.addf %157, %159 : vector<8x32xf32>
    %161 = math.tanh %160 : vector<8x32xf32>
    %162 = arith.mulf %155, %161 : vector<8x32xf32>
    %c3_i32 = arith.constant 3 : i32
    %163 = arith.index_cast %c3_i32 : i32 to index
    %c0_78 = arith.constant 0 : index
    %c0_79 = arith.constant 0 : index
    %164 = vector.load %arg8[%163, %c0_78, %c0_79] : memref<8x8x128xf32, #tpu.memory_space<vmem>>, vector<1x8x128xf32>
    %165 = vector.shape_cast %164 : vector<1x8x128xf32> to vector<8x128xf32>
    %166 = arith.truncf %162 : vector<8x32xf32> to vector<8x32xbf16>
    %c0_80 = arith.constant 0 : index
    %c0_81 = arith.constant 0 : index
    %167 = vector.load %arg3[%c0_80, %c0_81] : memref<32x128xbf16, #tpu.memory_space<vmem>>, vector<32x128xbf16>
    %cst_82 = arith.constant dense<0.000000e+00> : vector<8x128xf32>
    %168 = tpu.matmul %166, %167, %cst_82 {dimension_numbers = #tpu.dot_dimension_numbers<[1], [0], [0], [1], [0, 0, 1, 1], [], []>} : vector<8x32xbf16>, vector<32x128xbf16>, vector<8x128xf32> -> vector<8x128xf32>
    %169 = arith.addf %165, %168 : vector<8x128xf32>
    %170 = vector.extract_strided_slice %169 {offsets = [0, 0], sizes = [8, 64], strides = [1, 1]} : vector<8x128xf32> to vector<8x64xf32>
    %171 = arith.negf %170 : vector<8x64xf32>
    %172 = math.exp %171 : vector<8x64xf32>
    %cst_83 = arith.constant 1.000000e+00 : f32
    %173 = vector.broadcast %cst_83 : f32 to vector<8x64xf32>
    %174 = arith.addf %173, %172 : vector<8x64xf32>
    %175 = arith.divf %173, %174 : vector<8x64xf32>
    %176 = vector.extract_strided_slice %169 {offsets = [0, 64], sizes = [8, 32], strides = [1, 1]} : vector<8x128xf32> to vector<8x32xf32>
    %177 = math.tanh %176 : vector<8x32xf32>
    %178 = vector.extract_strided_slice %169 {offsets = [0, 96], sizes = [8, 32], strides = [1, 1]} : vector<8x128xf32> to vector<8x32xf32>
    %179 = arith.negf %178 : vector<8x32xf32>
    %180 = math.exp %179 : vector<8x32xf32>
    %cst_84 = arith.constant 1.000000e+00 : f32
    %181 = vector.broadcast %cst_84 : f32 to vector<8x32xf32>
    %182 = arith.addf %181, %180 : vector<8x32xf32>
    %183 = arith.divf %181, %182 : vector<8x32xf32>
    %184 = vector.extract_strided_slice %175 {offsets = [0, 32], sizes = [8, 32], strides = [1, 1]} : vector<8x64xf32> to vector<8x32xf32>
    %185 = arith.mulf %184, %160 : vector<8x32xf32>
    %186 = vector.extract_strided_slice %175 {offsets = [0, 0], sizes = [8, 32], strides = [1, 1]} : vector<8x64xf32> to vector<8x32xf32>
    %187 = arith.mulf %186, %177 : vector<8x32xf32>
    %188 = arith.addf %185, %187 : vector<8x32xf32>
    %189 = math.tanh %188 : vector<8x32xf32>
    %190 = arith.mulf %183, %189 : vector<8x32xf32>
    %c4_i32 = arith.constant 4 : i32
    %191 = arith.index_cast %c4_i32 : i32 to index
    %c0_85 = arith.constant 0 : index
    %c0_86 = arith.constant 0 : index
    %192 = vector.load %arg8[%191, %c0_85, %c0_86] : memref<8x8x128xf32, #tpu.memory_space<vmem>>, vector<1x8x128xf32>
    %193 = vector.shape_cast %192 : vector<1x8x128xf32> to vector<8x128xf32>
    %194 = arith.truncf %190 : vector<8x32xf32> to vector<8x32xbf16>
    %c0_87 = arith.constant 0 : index
    %c0_88 = arith.constant 0 : index
    %195 = vector.load %arg3[%c0_87, %c0_88] : memref<32x128xbf16, #tpu.memory_space<vmem>>, vector<32x128xbf16>
    %cst_89 = arith.constant dense<0.000000e+00> : vector<8x128xf32>
    %196 = tpu.matmul %194, %195, %cst_89 {dimension_numbers = #tpu.dot_dimension_numbers<[1], [0], [0], [1], [0, 0, 1, 1], [], []>} : vector<8x32xbf16>, vector<32x128xbf16>, vector<8x128xf32> -> vector<8x128xf32>
    %197 = arith.addf %193, %196 : vector<8x128xf32>
    %198 = vector.extract_strided_slice %197 {offsets = [0, 0], sizes = [8, 64], strides = [1, 1]} : vector<8x128xf32> to vector<8x64xf32>
    %199 = arith.negf %198 : vector<8x64xf32>
    %200 = math.exp %199 : vector<8x64xf32>
    %cst_90 = arith.constant 1.000000e+00 : f32
    %201 = vector.broadcast %cst_90 : f32 to vector<8x64xf32>
    %202 = arith.addf %201, %200 : vector<8x64xf32>
    %203 = arith.divf %201, %202 : vector<8x64xf32>
    %204 = vector.extract_strided_slice %197 {offsets = [0, 64], sizes = [8, 32], strides = [1, 1]} : vector<8x128xf32> to vector<8x32xf32>
    %205 = math.tanh %204 : vector<8x32xf32>
    %206 = vector.extract_strided_slice %197 {offsets = [0, 96], sizes = [8, 32], strides = [1, 1]} : vector<8x128xf32> to vector<8x32xf32>
    %207 = arith.negf %206 : vector<8x32xf32>
    %208 = math.exp %207 : vector<8x32xf32>
    %cst_91 = arith.constant 1.000000e+00 : f32
    %209 = vector.broadcast %cst_91 : f32 to vector<8x32xf32>
    %210 = arith.addf %209, %208 : vector<8x32xf32>
    %211 = arith.divf %209, %210 : vector<8x32xf32>
    %212 = vector.extract_strided_slice %203 {offsets = [0, 32], sizes = [8, 32], strides = [1, 1]} : vector<8x64xf32> to vector<8x32xf32>
    %213 = arith.mulf %212, %188 : vector<8x32xf32>
    %214 = vector.extract_strided_slice %203 {offsets = [0, 0], sizes = [8, 32], strides = [1, 1]} : vector<8x64xf32> to vector<8x32xf32>
    %215 = arith.mulf %214, %205 : vector<8x32xf32>
    %216 = arith.addf %213, %215 : vector<8x32xf32>
    %217 = math.tanh %216 : vector<8x32xf32>
    %218 = arith.mulf %211, %217 : vector<8x32xf32>
    %c5_i32 = arith.constant 5 : i32
    %219 = arith.index_cast %c5_i32 : i32 to index
    %c0_92 = arith.constant 0 : index
    %c0_93 = arith.constant 0 : index
    %220 = vector.load %arg8[%219, %c0_92, %c0_93] : memref<8x8x128xf32, #tpu.memory_space<vmem>>, vector<1x8x128xf32>
    %221 = vector.shape_cast %220 : vector<1x8x128xf32> to vector<8x128xf32>
    %222 = arith.truncf %218 : vector<8x32xf32> to vector<8x32xbf16>
    %c0_94 = arith.constant 0 : index
    %c0_95 = arith.constant 0 : index
    %223 = vector.load %arg3[%c0_94, %c0_95] : memref<32x128xbf16, #tpu.memory_space<vmem>>, vector<32x128xbf16>
    %cst_96 = arith.constant dense<0.000000e+00> : vector<8x128xf32>
    %224 = tpu.matmul %222, %223, %cst_96 {dimension_numbers = #tpu.dot_dimension_numbers<[1], [0], [0], [1], [0, 0, 1, 1], [], []>} : vector<8x32xbf16>, vector<32x128xbf16>, vector<8x128xf32> -> vector<8x128xf32>
    %225 = arith.addf %221, %224 : vector<8x128xf32>
    %226 = vector.extract_strided_slice %225 {offsets = [0, 0], sizes = [8, 64], strides = [1, 1]} : vector<8x128xf32> to vector<8x64xf32>
    %227 = arith.negf %226 : vector<8x64xf32>
    %228 = math.exp %227 : vector<8x64xf32>
    %cst_97 = arith.constant 1.000000e+00 : f32
    %229 = vector.broadcast %cst_97 : f32 to vector<8x64xf32>
    %230 = arith.addf %229, %228 : vector<8x64xf32>
    %231 = arith.divf %229, %230 : vector<8x64xf32>
    %232 = vector.extract_strided_slice %225 {offsets = [0, 64], sizes = [8, 32], strides = [1, 1]} : vector<8x128xf32> to vector<8x32xf32>
    %233 = math.tanh %232 : vector<8x32xf32>
    %234 = vector.extract_strided_slice %225 {offsets = [0, 96], sizes = [8, 32], strides = [1, 1]} : vector<8x128xf32> to vector<8x32xf32>
    %235 = arith.negf %234 : vector<8x32xf32>
    %236 = math.exp %235 : vector<8x32xf32>
    %cst_98 = arith.constant 1.000000e+00 : f32
    %237 = vector.broadcast %cst_98 : f32 to vector<8x32xf32>
    %238 = arith.addf %237, %236 : vector<8x32xf32>
    %239 = arith.divf %237, %238 : vector<8x32xf32>
    %240 = vector.extract_strided_slice %231 {offsets = [0, 32], sizes = [8, 32], strides = [1, 1]} : vector<8x64xf32> to vector<8x32xf32>
    %241 = arith.mulf %240, %216 : vector<8x32xf32>
    %242 = vector.extract_strided_slice %231 {offsets = [0, 0], sizes = [8, 32], strides = [1, 1]} : vector<8x64xf32> to vector<8x32xf32>
    %243 = arith.mulf %242, %233 : vector<8x32xf32>
    %244 = arith.addf %241, %243 : vector<8x32xf32>
    %245 = math.tanh %244 : vector<8x32xf32>
    %246 = arith.mulf %239, %245 : vector<8x32xf32>
    %c6_i32 = arith.constant 6 : i32
    %247 = arith.index_cast %c6_i32 : i32 to index
    %c0_99 = arith.constant 0 : index
    %c0_100 = arith.constant 0 : index
    %248 = vector.load %arg8[%247, %c0_99, %c0_100] : memref<8x8x128xf32, #tpu.memory_space<vmem>>, vector<1x8x128xf32>
    %249 = vector.shape_cast %248 : vector<1x8x128xf32> to vector<8x128xf32>
    %250 = arith.truncf %246 : vector<8x32xf32> to vector<8x32xbf16>
    %c0_101 = arith.constant 0 : index
    %c0_102 = arith.constant 0 : index
    %251 = vector.load %arg3[%c0_101, %c0_102] : memref<32x128xbf16, #tpu.memory_space<vmem>>, vector<32x128xbf16>
    %cst_103 = arith.constant dense<0.000000e+00> : vector<8x128xf32>
    %252 = tpu.matmul %250, %251, %cst_103 {dimension_numbers = #tpu.dot_dimension_numbers<[1], [0], [0], [1], [0, 0, 1, 1], [], []>} : vector<8x32xbf16>, vector<32x128xbf16>, vector<8x128xf32> -> vector<8x128xf32>
    %253 = arith.addf %249, %252 : vector<8x128xf32>
    %254 = vector.extract_strided_slice %253 {offsets = [0, 0], sizes = [8, 64], strides = [1, 1]} : vector<8x128xf32> to vector<8x64xf32>
    %255 = arith.negf %254 : vector<8x64xf32>
    %256 = math.exp %255 : vector<8x64xf32>
    %cst_104 = arith.constant 1.000000e+00 : f32
    %257 = vector.broadcast %cst_104 : f32 to vector<8x64xf32>
    %258 = arith.addf %257, %256 : vector<8x64xf32>
    %259 = arith.divf %257, %258 : vector<8x64xf32>
    %260 = vector.extract_strided_slice %253 {offsets = [0, 64], sizes = [8, 32], strides = [1, 1]} : vector<8x128xf32> to vector<8x32xf32>
    %261 = math.tanh %260 : vector<8x32xf32>
    %262 = vector.extract_strided_slice %253 {offsets = [0, 96], sizes = [8, 32], strides = [1, 1]} : vector<8x128xf32> to vector<8x32xf32>
    %263 = arith.negf %262 : vector<8x32xf32>
    %264 = math.exp %263 : vector<8x32xf32>
    %cst_105 = arith.constant 1.000000e+00 : f32
    %265 = vector.broadcast %cst_105 : f32 to vector<8x32xf32>
    %266 = arith.addf %265, %264 : vector<8x32xf32>
    %267 = arith.divf %265, %266 : vector<8x32xf32>
    %268 = vector.extract_strided_slice %259 {offsets = [0, 32], sizes = [8, 32], strides = [1, 1]} : vector<8x64xf32> to vector<8x32xf32>
    %269 = arith.mulf %268, %244 : vector<8x32xf32>
    %270 = vector.extract_strided_slice %259 {offsets = [0, 0], sizes = [8, 32], strides = [1, 1]} : vector<8x64xf32> to vector<8x32xf32>
    %271 = arith.mulf %270, %261 : vector<8x32xf32>
    %272 = arith.addf %269, %271 : vector<8x32xf32>
    %273 = math.tanh %272 : vector<8x32xf32>
    %274 = arith.mulf %267, %273 : vector<8x32xf32>
    %c7_i32 = arith.constant 7 : i32
    %275 = arith.index_cast %c7_i32 : i32 to index
    %c0_106 = arith.constant 0 : index
    %c0_107 = arith.constant 0 : index
    %276 = vector.load %arg8[%275, %c0_106, %c0_107] : memref<8x8x128xf32, #tpu.memory_space<vmem>>, vector<1x8x128xf32>
    %277 = vector.shape_cast %276 : vector<1x8x128xf32> to vector<8x128xf32>
    %278 = arith.truncf %274 : vector<8x32xf32> to vector<8x32xbf16>
    %c0_108 = arith.constant 0 : index
    %c0_109 = arith.constant 0 : index
    %279 = vector.load %arg3[%c0_108, %c0_109] : memref<32x128xbf16, #tpu.memory_space<vmem>>, vector<32x128xbf16>
    %cst_110 = arith.constant dense<0.000000e+00> : vector<8x128xf32>
    %280 = tpu.matmul %278, %279, %cst_110 {dimension_numbers = #tpu.dot_dimension_numbers<[1], [0], [0], [1], [0, 0, 1, 1], [], []>} : vector<8x32xbf16>, vector<32x128xbf16>, vector<8x128xf32> -> vector<8x128xf32>
    %281 = arith.addf %277, %280 : vector<8x128xf32>
    %282 = vector.extract_strided_slice %281 {offsets = [0, 0], sizes = [8, 64], strides = [1, 1]} : vector<8x128xf32> to vector<8x64xf32>
    %283 = arith.negf %282 : vector<8x64xf32>
    %284 = math.exp %283 : vector<8x64xf32>
    %cst_111 = arith.constant 1.000000e+00 : f32
    %285 = vector.broadcast %cst_111 : f32 to vector<8x64xf32>
    %286 = arith.addf %285, %284 : vector<8x64xf32>
    %287 = arith.divf %285, %286 : vector<8x64xf32>
    %288 = vector.extract_strided_slice %281 {offsets = [0, 64], sizes = [8, 32], strides = [1, 1]} : vector<8x128xf32> to vector<8x32xf32>
    %289 = math.tanh %288 : vector<8x32xf32>
    %290 = vector.extract_strided_slice %281 {offsets = [0, 96], sizes = [8, 32], strides = [1, 1]} : vector<8x128xf32> to vector<8x32xf32>
    %291 = arith.negf %290 : vector<8x32xf32>
    %292 = math.exp %291 : vector<8x32xf32>
    %cst_112 = arith.constant 1.000000e+00 : f32
    %293 = vector.broadcast %cst_112 : f32 to vector<8x32xf32>
    %294 = arith.addf %293, %292 : vector<8x32xf32>
    %295 = arith.divf %293, %294 : vector<8x32xf32>
    %296 = vector.extract_strided_slice %287 {offsets = [0, 32], sizes = [8, 32], strides = [1, 1]} : vector<8x64xf32> to vector<8x32xf32>
    %297 = arith.mulf %296, %272 : vector<8x32xf32>
    %298 = vector.extract_strided_slice %287 {offsets = [0, 0], sizes = [8, 32], strides = [1, 1]} : vector<8x64xf32> to vector<8x32xf32>
    %299 = arith.mulf %298, %289 : vector<8x32xf32>
    %300 = arith.addf %297, %299 : vector<8x32xf32>
    %301 = math.tanh %300 : vector<8x32xf32>
    %302 = arith.mulf %295, %301 : vector<8x32xf32>
    %c8_i32 = arith.constant 8 : i32
    %c0_113 = arith.constant 0 : index
    %c0_114 = arith.constant 0 : index
    %303 = vector.load %arg9[%c0_113, %c0_114] : memref<8x32xf32, #tpu.memory_space<vmem>>, vector<8x32xf32>
    tpu.vector_store %arg9[%c0_113, %c0_114], %302 {strides = array<i32>} : memref<8x32xf32, #tpu.memory_space<vmem>>, vector<8x32xf32>,
    %c0_115 = arith.constant 0 : index
    %c0_116 = arith.constant 0 : index
    %304 = vector.load %arg10[%c0_115, %c0_116] : memref<8x32xf32, #tpu.memory_space<vmem>>, vector<8x32xf32>
    tpu.vector_store %arg10[%c0_115, %c0_116], %300 {strides = array<i32>} : memref<8x32xf32, #tpu.memory_space<vmem>>, vector<8x32xf32>,
    %c1_i32_117 = arith.constant 1 : i32
    %305 = arith.cmpi eq, %arg0, %c1_i32_117 : i32
    %306 = arith.extui %305 : i1 to i32
    %c0_i32_118 = arith.constant 0 : i32
    %307 = arith.cmpi ne, %306, %c0_i32_118 : i32
    scf.if %307 {
      %308 = arith.truncf %302 : vector<8x32xf32> to vector<8x32xbf16>
      %c0_119 = arith.constant 0 : index
      %c0_120 = arith.constant 0 : index
      %309 = vector.load %arg5[%c0_119, %c0_120] : memref<32x128xbf16, #tpu.memory_space<vmem>>, vector<32x128xbf16>
      %cst_121 = arith.constant dense<0.000000e+00> : vector<8x128xf32>
      %310 = tpu.matmul %308, %309, %cst_121 {dimension_numbers = #tpu.dot_dimension_numbers<[1], [0], [0], [1], [0, 0, 1, 1], [], []>} : vector<8x32xbf16>, vector<32x128xbf16>, vector<8x128xf32> -> vector<8x128xf32>
      %c0_122 = arith.constant 0 : index
      %c0_123 = arith.constant 0 : index
      %311 = vector.load %arg6[%c0_122, %c0_123] : memref<1x128xf32, #tpu.memory_space<vmem>>, vector<1x128xf32>
      %312 = vector.broadcast %311 : vector<1x128xf32> to vector<8x128xf32>
      %313 = arith.addf %310, %312 : vector<8x128xf32>
      %c0_124 = arith.constant 0 : index
      %c0_125 = arith.constant 0 : index
      %314 = vector.load %arg7[%c0_124, %c0_125] : memref<8x128xf32, #tpu.memory_space<vmem>>, vector<8x128xf32>
      tpu.vector_store %arg7[%c0_124, %c0_125], %313 {strides = array<i32>} : memref<8x128xf32, #tpu.memory_space<vmem>>, vector<8x128xf32>,
    } else {
    }
    return
  }
  func.func @transform_0(%arg0: i32) -> (i32, i32, i32) {
    %c0_i32 = arith.constant 0 : i32
    %c0_i32_0 = arith.constant 0 : i32
    %c0_i32_1 = arith.constant 0 : i32
    return %c0_i32, %arg0, %c0_i32_0 : i32, i32, i32
  }
  func.func @transform_1(%arg0: i32) -> (i32, i32) {
    %c0_i32 = arith.constant 0 : i32
    %c0_i32_0 = arith.constant 0 : i32
    %c0_i32_1 = arith.constant 0 : i32
    return %c0_i32, %c0_i32_0 : i32, i32
  }
  func.func @transform_2(%arg0: i32) -> (i32, i32) {
    %c0_i32 = arith.constant 0 : i32
    %c0_i32_0 = arith.constant 0 : i32
    %c0_i32_1 = arith.constant 0 : i32
    return %c0_i32, %c0_i32_0 : i32, i32
  }
  func.func @transform_3(%arg0: i32) -> (i32, i32) {
    %c0_i32 = arith.constant 0 : i32
    %c0_i32_0 = arith.constant 0 : i32
    %c0_i32_1 = arith.constant 0 : i32
    return %c0_i32, %c0_i32_0 : i32, i32
  }
  func.func @transform_4(%arg0: i32) -> (i32, i32) {
    %c0_i32 = arith.constant 0 : i32
    %c0_i32_0 = arith.constant 0 : i32
    %c0_i32_1 = arith.constant 0 : i32
    return %c0_i32, %c0_i32_0 : i32, i32
  }
  func.func @transform_5(%arg0: i32) -> (i32, i32) {
    %c0_i32 = arith.constant 0 : i32
    %c0_i32_0 = arith.constant 0 : i32
    %c0_i32_1 = arith.constant 0 : i32
    return %c0_i32, %c0_i32_0 : i32, i32
  }
  func.func @transform_6(%arg0: i32) -> (i32, i32) {
    %c0_i32 = arith.constant 0 : i32
    %c0_i32_0 = arith.constant 0 : i32
    %c0_i32_1 = arith.constant 0 : i32
    return %c0_i32, %c0_i32_0 : i32, i32
  }
}

</mosaic_0001>

<llo_original>
// kernel: tpu_custom_call.1
$region0: #{tpu_custom_call.1}
  #allocation0 [shape = 'u32[]', space=smem, size = 0x4, offset = 0x4, fixed_abs, tag = 'smem constant byte address 0x4 - core index']
  #allocation1 [shape = 'u32[144,128]{1,0:T(1,128)}', space=vmem, size = 0x12000, scoped, tag = 'internal scratch']
  #allocation2 [shape = 'f32[8,8,128]{2,1,0:T(8,128)}', space=vmem, size = 0x8000, scoped, tag = 'scratch operand']
  #allocation3 [shape = 'f32[8,32]{1,0:T(8,128)}', space=vmem, size = 0x1000, scoped, tag = 'scratch operand']
  #allocation4 [shape = 'f32[8,32]{1,0:T(8,128)}', space=vmem, size = 0x1000, scoped, tag = 'scratch operand']
  %s0 = inlined_call_operand.vmem [shape: f32[8,16,4], index: 0, kind: input, shape index: {}]
  %s1 = inlined_call_operand.vmem [shape: bf16[4,128], index: 1, kind: input, shape index: {}]
  %s2 = inlined_call_operand.vmem [shape: bf16[32,128], index: 2, kind: input, shape index: {}]
  %s3 = inlined_call_operand.vmem [shape: f32[1,128], index: 3, kind: input, shape index: {}]
  %s4 = inlined_call_operand.vmem [shape: bf16[32,128], index: 4, kind: input, shape index: {}]
  %s5 = inlined_call_operand.vmem [shape: f32[1,128], index: 5, kind: input, shape index: {}]
  %s6 = inlined_call_operand.hbm [shape: f32[8,128], index: 6, kind: output, shape index: {}]
  %s7 = sld [smem:[#allocation0]]
  $region103: #{tpu_custom_call.1} parent=0
    _
  %s9 = ssub.s32 1, %s7
  %s10 = scalar_select 0, %s9, %s7
  $region1: #{tpu_custom_call.1} parent=0
    #allocation5 [shape = 'u8[65536]{0}', space=vmem, size = 0x10000, scoped, tag = 'input window, operand 0']
    #allocation6 [shape = 'u8[4096]{0}', space=vmem, size = 0x1000, scoped, tag = 'output window, operand 0, single buffered']
    #allocation7 [shape = 's32[2]{0}', space=sflag, size = 0x8, scoped, tag = 'scoped memory for tpu_custom_call.1']
    %11 = vsyncpa [#allocation7], 0
    loop: start=0, step=1, limit=4
    $region2: #{tpu_custom_call.1} parent=1 // loop_pre_header
      _
    $region3: #{tpu_custom_call.1} parent=1 // loop_header
      %s13 = sphi 0, %s17
      %p14 = scmp.ge.s32.totalorder %s13, 4
      %s23 = sphi 0, %s25
      %s26 = sphi 0, %s23
      %s27 = sphi 0, %s26
      %s43 = sphi 0, %s27
      %s47 = sphi 0, %s47
      %s49 = sphi 0, %s47
      %s50 = sphi 0, %s49
      %s64 = sphi 0, %s50
      %s68 = sphi 0, %s68
      %s70 = sphi 0, %s68
      %s71 = sphi 0, %s70
      %s85 = sphi 0, %s71
      %s89 = sphi 0, %s89
      %s91 = sphi 0, %s89
      %s92 = sphi 0, %s91
      %s106 = sphi 0, %s92
      %s110 = sphi 0, %s110
      %s112 = sphi 0, %s110
      %s113 = sphi 0, %s112
      %s127 = sphi 0, %s113
      %s131 = sphi 0, %s131
      %s133 = sphi 0, %s131
      %s134 = sphi 0, %s133
      %s148 = sphi 0, %s134
      %s152 = sphi 0, %s152
      %s154 = sphi 0, %s152
      %s155 = sphi 0, %s154
      %s169 = sphi 0, %s155
    $region4: #{tpu_custom_call.1} parent=1 // loop_header_branch
      %16 = sbr.rel (%p14) target = $region8
    $region5: #{tpu_custom_call.1} parent=1 // loop_body
      %s18 = ssub.s32 %s13, 1
      %s19 = ssub.s32 %s13, 2
      %s20 = sadd.s32 %s13, 1
      %s21 = ssub.s32 %s13, %s20
      %p22 = scmp.eq.s32.totalorder %s21, 0
      %s24 = sadd.s32 %s23, 1
      %s25 = scalar_select %p22, %s23, %s24
      %p28 = pneg %p22
      %p29 = scmp.eq.s32.totalorder %s13, 1
      %p30 = por %p28, %p29
      %p31 = scmp.ne.s32.totalorder %s23, %s26
      %p32 = scmp.eq.s32.totalorder %s13, 0
      %p33 = por %p31, %p32
      %p34 = scmp.ne.s32.totalorder %s23, %s26
      %p35 = scmp.eq.s32.totalorder %s18, 1
      %p36 = por %p34, %p35
      %p37 = scmp.ne.s32.totalorder %s26, %s27
      %p38 = scmp.eq.s32.totalorder %s18, 0
      %p39 = por %p37, %p38
      %p40 = scmp.ne.s32.totalorder %s26, %s27
      %p41 = scmp.eq.s32.totalorder %s19, 1
      %p42 = por %p40, %p41
      %p44 = scmp.ne.s32.totalorder %s27, %s43
      %p45 = scmp.eq.s32.totalorder %s19, 0
      %p46 = por %p44, %p45
      %s48 = sadd.s32 %s47, 1
      %p51 = scmp.eq.s32.totalorder %s13, 1
      %p52 = scmp.ne.s32.totalorder %s47, %s49
      %p53 = scmp.eq.s32.totalorder %s13, 0
      %p54 = por %p52, %p53
      %p55 = scmp.ne.s32.totalorder %s47, %s49
      %p56 = scmp.eq.s32.totalorder %s18, 1
      %p57 = por %p55, %p56
      %p58 = scmp.ne.s32.totalorder %s49, %s50
      %p59 = scmp.eq.s32.totalorder %s18, 0
      %p60 = por %p58, %p59
      %p61 = scmp.ne.s32.totalorder %s49, %s50
      %p62 = scmp.eq.s32.totalorder %s19, 1
      %p63 = por %p61, %p62
      %p65 = scmp.ne.s32.totalorder %s50, %s64
      %p66 = scmp.eq.s32.totalorder %s19, 0
      %p67 = por %p65, %p66
      %s69 = sadd.s32 %s68, 1
      %p72 = scmp.eq.s32.totalorder %s13, 1
      %p73 = scmp.ne.s32.totalorder %s68, %s70
      %p74 = scmp.eq.s32.totalorder %s13, 0
      %p75 = por %p73, %p74
      %p76 = scmp.ne.s32.totalorder %s68, %s70
      %p77 = scmp.eq.s32.totalorder %s18, 1
      %p78 = por %p76, %p77
      %p79 = scmp.ne.s32.totalorder %s70, %s71
      %p80 = scmp.eq.s32.totalorder %s18, 0
      %p81 = por %p79, %p80
      %p82 = scmp.ne.s32.totalorder %s70, %s71
      %p83 = scmp.eq.s32.totalorder %s19, 1
      %p84 = por %p82, %p83
      %p86 = scmp.ne.s32.totalorder %s71, %s85
      %p87 = scmp.eq.s32.totalorder %s19, 0
      %p88 = por %p86, %p87
      %s90 = sadd.s32 %s89, 1
      %p93 = scmp.eq.s32.totalorder %s13, 1
      %p94 = scmp.ne.s32.totalorder %s89, %s91
      %p95 = scmp.eq.s32.totalorder %s13, 0
      %p96 = por %p94, %p95
      %p97 = scmp.ne.s32.totalorder %s89, %s91
      %p98 = scmp.eq.s32.totalorder %s18, 1
      %p99 = por %p97, %p98
      %p100 = scmp.ne.s32.totalorder %s91, %s92
      %p101 = scmp.eq.s32.totalorder %s18, 0
      %p102 = por %p100, %p101
      %p103 = scmp.ne.s32.totalorder %s91, %s92
      %p104 = scmp.eq.s32.totalorder %s19, 1
      %p105 = por %p103, %p104
      %p107 = scmp.ne.s32.totalorder %s92, %s106
      %p108 = scmp.eq.s32.totalorder %s19, 0
      %p109 = por %p107, %p108
      %s111 = sadd.s32 %s110, 1
      %p114 = scmp.eq.s32.totalorder %s13, 1
      %p115 = scmp.ne.s32.totalorder %s110, %s112
      %p116 = scmp.eq.s32.totalorder %s13, 0
      %p117 = por %p115, %p116
      %p118 = scmp.ne.s32.totalorder %s110, %s112
      %p119 = scmp.eq.s32.totalorder %s18, 1
      %p120 = por %p118, %p119
      %p121 = scmp.ne.s32.totalorder %s112, %s113
      %p122 = scmp.eq.s32.totalorder %s18, 0
      %p123 = por %p121, %p122
      %p124 = scmp.ne.s32.totalorder %s112, %s113
      %p125 = scmp.eq.s32.totalorder %s19, 1
      %p126 = por %p124, %p125
      %p128 = scmp.ne.s32.totalorder %s113, %s127
      %p129 = scmp.eq.s32.totalorder %s19, 0
      %p130 = por %p128, %p129
      %s132 = sadd.s32 %s131, 1
      %p135 = scmp.eq.s32.totalorder %s13, 1
      %p136 = scmp.ne.s32.totalorder %s131, %s133
      %p137 = scmp.eq.s32.totalorder %s13, 0
      %p138 = por %p136, %p137
      %p139 = scmp.ne.s32.totalorder %s131, %s133
      %p140 = scmp.eq.s32.totalorder %s18, 1
      %p141 = por %p139, %p140
      %p142 = scmp.ne.s32.totalorder %s133, %s134
      %p143 = scmp.eq.s32.totalorder %s18, 0
      %p144 = por %p142, %p143
      %p145 = scmp.ne.s32.totalorder %s133, %s134
      %p146 = scmp.eq.s32.totalorder %s19, 1
      %p147 = por %p145, %p146
      %p149 = scmp.ne.s32.totalorder %s134, %s148
      %p150 = scmp.eq.s32.totalorder %s19, 0
      %p151 = por %p149, %p150
      %s153 = sadd.s32 %s152, 1
      %p156 = scmp.eq.s32.totalorder %s13, 1
      %p157 = scmp.ne.s32.totalorder %s152, %s154
      %p158 = scmp.eq.s32.totalorder %s13, 0
      %p159 = por %p157, %p158
      %p160 = scmp.ne.s32.totalorder %s152, %s154
      %p161 = scmp.eq.s32.totalorder %s18, 1
      %p162 = por %p160, %p161
      %p163 = scmp.ne.s32.totalorder %s154, %s155
      %p164 = scmp.eq.s32.totalorder %s18, 0
      %p165 = por %p163, %p164
      %p166 = scmp.ne.s32.totalorder %s154, %s155
      %p167 = scmp.eq.s32.totalorder %s19, 1
      %p168 = por %p166, %p167
      %p170 = scmp.ne.s32.totalorder %s155, %s169
      %p171 = scmp.eq.s32.totalorder %s19, 0
      %p172 = por %p170, %p171
      %p173 = scmp.le.s32.totalorder 1, %s13
      %p174 = scmp.lt.s32.totalorder %s13, 3
      %p175 = pnand %p173, %p174
      %p176 = pneg %p175
      // Predicated region
      $region9: #{tpu_custom_call.1} parent=5 // pred_check
        _
      $region10: #{tpu_custom_call.1} parent=5 // pred_check_branch
        %178 = sbr.rel (%p175) target = $region12
      $region11: #{tpu_custom_call.1} parent=5 // pred_region
        %s179 = ssub.s32 %s13, 1
        // Predicated region
        $region13: #{tpu_custom_call.1} parent=11 // pred_check
          %p180 = pneg %p60
        $region14: #{tpu_custom_call.1} parent=11 // pred_check_branch
          %182 = sbr.rel (%p180) target = $region16
        $region15: #{tpu_custom_call.1} parent=11 // pred_region
          _
        $region16: #{tpu_custom_call.1} parent=11 // pred_fallthru
          _
        // Predicated region
        $region17: #{tpu_custom_call.1} parent=11 // pred_check
          %p183 = pneg %p81
        $region18: #{tpu_custom_call.1} parent=11 // pred_check_branch
          %185 = sbr.rel (%p183) target = $region20
        $region19: #{tpu_custom_call.1} parent=11 // pred_region
          _
        $region20: #{tpu_custom_call.1} parent=11 // pred_fallthru
          _
        // Predicated region
        $region21: #{tpu_custom_call.1} parent=11 // pred_check
          %p186 = pneg %p102
        $region22: #{tpu_custom_call.1} parent=11 // pred_check_branch
          %188 = sbr.rel (%p186) target = $region24
        $region23: #{tpu_custom_call.1} parent=11 // pred_region
          _
        $region24: #{tpu_custom_call.1} parent=11 // pred_fallthru
          _
        // Predicated region
        $region25: #{tpu_custom_call.1} parent=11 // pred_check
          %p189 = pneg %p123
        $region26: #{tpu_custom_call.1} parent=11 // pred_check_branch
          %191 = sbr.rel (%p189) target = $region28
        $region27: #{tpu_custom_call.1} parent=11 // pred_region
          _
        $region28: #{tpu_custom_call.1} parent=11 // pred_fallthru
          _
        // Predicated region
        $region29: #{tpu_custom_call.1} parent=11 // pred_check
          %p192 = pneg %p144
        $region30: #{tpu_custom_call.1} parent=11 // pred_check_branch
          %194 = sbr.rel (%p192) target = $region32
        $region31: #{tpu_custom_call.1} parent=11 // pred_region
          _
        $region32: #{tpu_custom_call.1} parent=11 // pred_fallthru
          _
      $region12: #{tpu_custom_call.1} parent=5 // pred_fallthru
        _
      %p195 = scmp.lt.s32.totalorder %s13, 2
      // Predicated region
      $region33: #{tpu_custom_call.1} parent=5 // pred_check
        %p196 = pneg %p195
      $region34: #{tpu_custom_call.1} parent=5 // pred_check_branch
        %198 = sbr.rel (%p196) target = $region36
      $region35: #{tpu_custom_call.1} parent=5 // pred_region
        // Predicated region
        $region37: #{tpu_custom_call.1} parent=35 // pred_check
          %p199 = pneg %p33
        $region38: #{tpu_custom_call.1} parent=35 // pred_check_branch
          %201 = sbr.rel (%p199) target = $region40
        $region39: #{tpu_custom_call.1} parent=35 // pred_region
          %s202 = sand.u32 %s23, 1
          %s203 = sand.u32 %s23, 1
          %s204 = smul.addr %s203, 64
          %s205 = scalar_lea.vmem [#allocation5], %s204
          %s206 = smul.addr %s13, 8
          %s207 = scalar_lea.vmem %s0, %s206
          // Predicated region
          $region41: #{tpu_custom_call.1} parent=39 // pred_check
            _
          $region42: #{tpu_custom_call.1} parent=39 // pred_check_branch
            %209 = sbr.rel (0) target = $region44
          $region43: #{tpu_custom_call.1} parent=39 // pred_region
            // Predicated region
            $region45: #{tpu_custom_call.1} parent=43 // pred_check
              _
            $region46: #{tpu_custom_call.1} parent=43 // pred_check_branch
              %211 = sbr.rel (0) target = $region48
            $region47: #{tpu_custom_call.1} parent=43 // pred_region
              // Predicated region
              $region60: #{tpu_custom_call.1} parent=47 // pred_check
                _
              $region61: #{tpu_custom_call.1} parent=47 // pred_check_branch
                %240 = sbr.rel (0) target = $region63
              $region62: #{tpu_custom_call.1} parent=47 // pred_region
                loop: start=0, step=1, limit=1
                $region64: #{tpu_custom_call.1} parent=62 // loop_pre_header
                  _
                $region65: #{tpu_custom_call.1} parent=62 // loop_header
                  %s242 = sphi 0, %s246
                  %p243 = scmp.ge.s32.totalorder %s242, 1
                  %s247 = sphi %s207, %s207
                  %s248 = sphi %s205, %s205
                $region66: #{tpu_custom_call.1} parent=62 // loop_header_branch
                  %245 = sbr.rel (%p243) target = $region70
                $region67: #{tpu_custom_call.1} parent=62 // loop_body
                  %v249 = vld [vmem:[%s247] sm:$0xff]
                  %250 = vst [vmem:[%s248] sm:$0xff] %v249
                  %v251 = vld [vmem:[%s247 + $0x10] sm:$0xff]
                  %252 = vst [vmem:[%s248 + $0x8] sm:$0xff] %v251
                  %v253 = vld [vmem:[%s247 + $0x20] sm:$0xff]
                  %254 = vst [vmem:[%s248 + $0x10] sm:$0xff] %v253
                  %v255 = vld [vmem:[%s247 + $0x30] sm:$0xff]
                  %256 = vst [vmem:[%s248 + $0x18] sm:$0xff] %v255
                  %v257 = vld [vmem:[%s247 + $0x40] sm:$0xff]
                  %258 = vst [vmem:[%s248 + $0x20] sm:$0xff] %v257
                  %v259 = vld [vmem:[%s247 + $0x50] sm:$0xff]
                  %260 = vst [vmem:[%s248 + $0x28] sm:$0xff] %v259
                  %v261 = vld [vmem:[%s247 + $0x60] sm:$0xff]
                  %262 = vst [vmem:[%s248 + $0x30] sm:$0xff] %v261
                  %v263 = vld [vmem:[%s247 + $0x70] sm:$0xff]
                  %264 = vst [vmem:[%s248 + $0x38] sm:$0xff] %v263
                $region68: #{tpu_custom_call.1} parent=62 // loop_footer
                  %s246 = sadd.s32 1, %s242
                $region69: #{tpu_custom_call.1} parent=62 // loop_footer_branch
                  %241 = sbr.rel target = $region65
                $region70: #{tpu_custom_call.1} parent=62 // loop_exit
                  _
              $region63: #{tpu_custom_call.1} parent=47 // pred_fallthru
                _
              // Predicated region
              $region71: #{tpu_custom_call.1} parent=47 // pred_check
                _
              $region72: #{tpu_custom_call.1} parent=47 // pred_check_branch
                %266 = sbr.rel target = $region74
              $region73: #{tpu_custom_call.1} parent=47 // pred_region
                _
              $region74: #{tpu_custom_call.1} parent=47 // pred_fallthru
                _
            $region48: #{tpu_custom_call.1} parent=43 // pred_fallthru
              _
            // Predicated region
            $region49: #{tpu_custom_call.1} parent=43 // pred_check
              _
            $region50: #{tpu_custom_call.1} parent=43 // pred_check_branch
              %213 = sbr.rel target = $region52
            $region51: #{tpu_custom_call.1} parent=43 // pred_region
              loop: start=0, step=1, limit=1
              $region53: #{tpu_custom_call.1} parent=51 // loop_pre_header
                _
              $region54: #{tpu_custom_call.1} parent=51 // loop_header
                %s216 = sphi 0, %s220
                %p217 = scmp.ge.s32.totalorder %s216, 1
                %s221 = sphi %s207, %s207
                %s222 = sphi %s205, %s205
              $region55: #{tpu_custom_call.1} parent=51 // loop_header_branch
                %219 = sbr.rel (%p217) target = $region59
              $region56: #{tpu_custom_call.1} parent=51 // loop_body
                %v223 = vld [vmem:[%s221] sm:$0xff]
                %224 = vst [vmem:[%s222] sm:$0xff] %v223
                %v225 = vld [vmem:[%s221 + $0x10] sm:$0xff]
                %226 = vst [vmem:[%s222 + $0x8] sm:$0xff] %v225
                %v227 = vld [vmem:[%s221 + $0x20] sm:$0xff]
                %228 = vst [vmem:[%s222 + $0x10] sm:$0xff] %v227
                %v229 = vld [vmem:[%s221 + $0x30] sm:$0xff]
                %230 = vst [vmem:[%s222 + $0x18] sm:$0xff] %v229
                %v231 = vld [vmem:[%s221 + $0x40] sm:$0xff]
                %232 = vst [vmem:[%s222 + $0x20] sm:$0xff] %v231
                %v233 = vld [vmem:[%s221 + $0x50] sm:$0xff]
                %234 = vst [vmem:[%s222 + $0x28] sm:$0xff] %v233
                %v235 = vld [vmem:[%s221 + $0x60] sm:$0xff]
                %236 = vst [vmem:[%s222 + $0x30] sm:$0xff] %v235
                %v237 = vld [vmem:[%s221 + $0x70] sm:$0xff]
                %238 = vst [vmem:[%s222 + $0x38] sm:$0xff] %v237
              $region57: #{tpu_custom_call.1} parent=51 // loop_footer
                %s220 = sadd.s32 1, %s216
              $region58: #{tpu_custom_call.1} parent=51 // loop_footer_branch
                %215 = sbr.rel target = $region54
              $region59: #{tpu_custom_call.1} parent=51 // loop_exit
                _
            $region52: #{tpu_custom_call.1} parent=43 // pred_fallthru
              _
          $region44: #{tpu_custom_call.1} parent=39 // pred_fallthru
            _
          %267 = vnop
        $region40: #{tpu_custom_call.1} parent=35 // pred_fallthru
          _
      $region36: #{tpu_custom_call.1} parent=5 // pred_fallthru
        _
      %p268 = scmp.le.s32.totalorder 1, %s13
      %p269 = scmp.lt.s32.totalorder %s13, 3
      %p270 = pnand %p268, %p269
      %p271 = pneg %p270
      // Predicated region
      $region75: #{tpu_custom_call.1} parent=5 // pred_check
        _
      $region76: #{tpu_custom_call.1} parent=5 // pred_check_branch
        %273 = sbr.rel (%p270) target = $region78
      $region77: #{tpu_custom_call.1} parent=5 // pred_region
        %s274 = ssub.s32 %s13, 1
        %s275 = sand.u32 %s26, 1
        %s276 = sand.u32 %s26, 1
        %s277 = smul.addr %s276, 64
        %s278 = scalar_lea.vmem [#allocation5], %s277
        // Predicated region
        $region79: #{tpu_custom_call.1} parent=77 // pred_check
          %p279 = pneg %p39
        $region80: #{tpu_custom_call.1} parent=77 // pred_check_branch
          %281 = sbr.rel (%p279) target = $region82
        $region81: #{tpu_custom_call.1} parent=77 // pred_region
          _
        $region82: #{tpu_custom_call.1} parent=77 // pred_fallthru
          _
        %s282 = sand.u32 %s26, 1
        %s283 = sand.u32 %s26, 1
        %s284 = smul.addr %s283, 64
        %s285 = scalar_lea.vmem [#allocation5], %s284
        %p286 = pneg %p39
        %p287 = pneg %p36
        %p288 = pneg %p60
        %p289 = pneg %p57
        %p290 = pneg %p81
        %p291 = pneg %p78
        %p292 = pneg %p102
        %p293 = pneg %p99
        %p294 = pneg %p123
        %p295 = pneg %p120
        %p296 = pneg %p144
        %p297 = pneg %p141
        %p298 = pneg %p165
        %p299 = pneg %p162
        %p301 = scmp.eq.s32.totalorder %s18, 0
        // Predicated region
        $region83: #{tpu_custom_call.1} parent=77 // pred_check
          %p302 = pneg %p301
        $region84: #{tpu_custom_call.1} parent=77 // pred_check_branch
          %304 = sbr.rel (%p302) target = $region86
        $region85: #{tpu_custom_call.1} parent=77 // pred_region
          %vm305 = vcmask 261120
          %306 = vst.msk [vmem:[#allocation3] sm:$0xff] %vm305, 0.0
          %307 = vst.msk [vmem:[#allocation4] sm:$0xff] %vm305, 0.0
        $region86: #{tpu_custom_call.1} parent=77 // pred_fallthru
          _
        %v308 = vld [vmem:[%s1] sm:$0x3]
        %v309 = vld [vmem:[%s3] sm:$0x1]
        %v310 = vld [vmem:[%s278] sm:$0x1]
        %v311 = vld [vmem:[%s278 + $0x8] sm:$0x1]
        %v312 = vld [vmem:[%s278 + $0x10] sm:$0x1]
        %v313 = vld [vmem:[%s278 + $0x18] sm:$0x1]
        %v314 = vld [vmem:[%s278 + $0x20] sm:$0x1]
        %v315 = vld [vmem:[%s278 + $0x28] sm:$0x1]
        %v316 = vld [vmem:[%s278 + $0x30] sm:$0x1]
        %v317 = vld [vmem:[%s278 + $0x38] sm:$0x1]
        %v318 = vpack.c.bf16 %v310, %v310
        %v319 = vpack.c.bf16 %v311, %v311
        %v320 = vpack.c.bf16 %v312, %v312
        %v321 = vpack.c.bf16 %v313, %v313
        %v322 = vpack.c.bf16 %v314, %v314
        %v323 = vpack.c.bf16 %v315, %v315
        %v324 = vpack.c.bf16 %v316, %v316
        %v325 = vpack.c.bf16 %v317, %v317
        %v327 = vlaneseq
        %v328 = vshrl.u32 %v327, 7
        %v329 = vsub.s32 0, %v328
        %v330 = vrot.slane %v309, %v329
        %v340 = vunpack.c.l.b16 %v318
        %v341 = vunpack.c.l.b16 %v319
        %v342 = vunpack.c.l.b16 %v320
        %v343 = vunpack.c.l.b16 %v321
        %v344 = vunpack.c.l.b16 %v322
        %v345 = vunpack.c.l.b16 %v323
        %v346 = vunpack.c.l.b16 %v324
        %v347 = vunpack.c.l.b16 %v325
        %v348 = vrot.slane %v341, 7
        %vm349 = vcmask 1041409
        %v350 = vsel %vm349, %v348, %v340
        %v351 = vrot.slane %v342, 6
        %vm352 = vcmask 1042434
        %v353 = vsel %vm352, %v351, %v350
        %v354 = vrot.slane %v343, 5
        %vm355 = vcmask 1043459
        %v356 = vsel %vm355, %v354, %v353
        %v357 = vrot.slane %v344, 4
        %vm358 = vcmask 1044484
        %v359 = vsel %vm358, %v357, %v356
        %v360 = vrot.slane %v345, 3
        %vm361 = vcmask 1045509
        %v362 = vsel %vm361, %v360, %v359
        %v363 = vrot.slane %v346, 2
        %vm364 = vcmask 1046534
        %v365 = vsel %vm364, %v363, %v362
        %v366 = vrot.slane %v347, 1
        %vm367 = vcmask 1047559
        %v368 = vsel %vm367, %v366, %v365
        %v369 = vpack.c.b16 %v368, %v368
        %vm370 = vcmask 31744
        %v372 = vsel %vm370, %v369, 0
        %vm374 = vcmask 1041408
        %v376 = vsel %vm374, %v308, 0
        %378 = vmatprep.subr.bf16.mxu0 0
        %379 = vmatpush1.bf16.msra.mxu0 %v376
        %380 = vmatprep.subr.bf16.mxu0 0
        %381 = vmatpush1.bf16.msra.mxu0 0
        %382 = vmatprep.subr.bf16.mxu0 0
        %383 = vmatpush1.bf16.msra.mxu0 0
        %384 = vmatprep.subr.bf16.mxu0 0
        %385 = vmatpush1.bf16.msra.mxu0 0
        %386 = vmatprep.subr.bf16.mxu0 0
        %387 = vmatpush1.bf16.msra.mxu0 0
        %388 = vmatprep.subr.bf16.mxu0 0
        %389 = vmatpush1.bf16.msra.mxu0 0
        %390 = vmatprep.subr.bf16.mxu0 0
        %391 = vmatpush1.bf16.msra.mxu0 0
        %392 = vmatprep.subr.bf16.mxu0 0
        %393 = vmatpush1.bf16.msra.mxu0 0
        %394 = vmatprep.subr.bf16.mxu0 0
        %395 = vmatpush1.bf16.msra.mxu0 0
        %396 = vmatprep.subr.bf16.mxu0 0
        %397 = vmatpush1.bf16.msra.mxu0 0
        %398 = vmatprep.subr.bf16.mxu0 0
        %399 = vmatpush1.bf16.msra.mxu0 0
        %400 = vmatprep.subr.bf16.mxu0 0
        %401 = vmatpush1.bf16.msra.mxu0 0
        %402 = vmatprep.subr.bf16.mxu0 0
        %403 = vmatpush1.bf16.msra.mxu0 0
        %404 = vmatprep.subr.bf16.mxu0 0
        %405 = vmatpush1.bf16.msra.mxu0 0
        %406 = vmatprep.subr.bf16.mxu0 0
        %407 = vmatpush1.bf16.msra.mxu0 0
        %408 = vmatprep.subr.bf16.mxu0 0
        %409 = vmatpush1.bf16.msra.mxu0 0
        %410 = vmatprep.mubr.bf16.mxu0 0
        %411 = vmatmul.mubr.bf16.gmra.mrb[0].mxu0 %v372
        %v412 = vpop.f32.mrb[0].mxu0
        %v413 = vadd.f32 %v330, %v412
        %v414 = vpop.f32.mrb[0].mxu0
        %v415 = vpop.f32.mrb[0].mxu0
        %v416 = vpop.f32.mrb[0].mxu0
        %417 = vdwg.mxu0
        %418 = vst [vmem:[#allocation2] sm:$0xff] %v413
        %v419 = vld [vmem:[%s278 + $0x1] sm:$0x1]
        %v420 = vld [vmem:[%s278 + $0x9] sm:$0x1]
        %v421 = vld [vmem:[%s278 + $0x11] sm:$0x1]
        %v422 = vld [vmem:[%s278 + $0x19] sm:$0x1]
        %v423 = vld [vmem:[%s278 + $0x21] sm:$0x1]
        %v424 = vld [vmem:[%s278 + $0x29] sm:$0x1]
        %v425 = vld [vmem:[%s278 + $0x31] sm:$0x1]
        %v426 = vld [vmem:[%s278 + $0x39] sm:$0x1]
        %v427 = vpack.c.bf16 %v419, %v419
        %v428 = vpack.c.bf16 %v420, %v420
        %v429 = vpack.c.bf16 %v421, %v421
        %v430 = vpack.c.bf16 %v422, %v422
        %v431 = vpack.c.bf16 %v423, %v423
        %v432 = vpack.c.bf16 %v424, %v424
        %v433 = vpack.c.bf16 %v425, %v425
        %v434 = vpack.c.bf16 %v426, %v426
        %v443 = vunpack.c.l.b16 %v427
        %v444 = vunpack.c.l.b16 %v428
        %v445 = vunpack.c.l.b16 %v429
        %v446 = vunpack.c.l.b16 %v430
        %v447 = vunpack.c.l.b16 %v431
        %v448 = vunpack.c.l.b16 %v432
        %v449 = vunpack.c.l.b16 %v433
        %v450 = vunpack.c.l.b16 %v434
        %v451 = vrot.slane %v444, 7
        %v452 = vsel %vm349, %v451, %v443
        %v453 = vrot.slane %v445, 6
        %v454 = vsel %vm352, %v453, %v452
        %v455 = vrot.slane %v446, 5
        %v456 = vsel %vm355, %v455, %v454
        %v457 = vrot.slane %v447, 4
        %v458 = vsel %vm358, %v457, %v456
        %v459 = vrot.slane %v448, 3
        %v460 = vsel %vm361, %v459, %v458
        %v461 = vrot.slane %v449, 2
        %v462 = vsel %vm364, %v461, %v460
        %v463 = vrot.slane %v450, 1
        %v464 = vsel %vm367, %v463, %v462
        %v465 = vpack.c.b16 %v464, %v464
        %v467 = vsel %vm370, %v465, 0
        %469 = vmatprep.subr.bf16.mxu0 0
        %470 = vmatpush1.bf16.msra.mxu0 %v376
        %471 = vmatprep.subr.bf16.mxu0 0
        %472 = vmatpush1.bf16.msra.mxu0 0
        %473 = vmatprep.subr.bf16.mxu0 0
        %474 = vmatpush1.bf16.msra.mxu0 0
        %475 = vmatprep.subr.bf16.mxu0 0
        %476 = vmatpush1.bf16.msra.mxu0 0
        %477 = vmatprep.subr.bf16.mxu0 0
        %478 = vmatpush1.bf16.msra.mxu0 0
        %479 = vmatprep.subr.bf16.mxu0 0
        %480 = vmatpush1.bf16.msra.mxu0 0
        %481 = vmatprep.subr.bf16.mxu0 0
        %482 = vmatpush1.bf16.msra.mxu0 0
        %483 = vmatprep.subr.bf16.mxu0 0
        %484 = vmatpush1.bf16.msra.mxu0 0
        %485 = vmatprep.subr.bf16.mxu0 0
        %486 = vmatpush1.bf16.msra.mxu0 0
        %487 = vmatprep.subr.bf16.mxu0 0
        %488 = vmatpush1.bf16.msra.mxu0 0
        %489 = vmatprep.subr.bf16.mxu0 0
        %490 = vmatpush1.bf16.msra.mxu0 0
        %491 = vmatprep.subr.bf16.mxu0 0
        %492 = vmatpush1.bf16.msra.mxu0 0
        %493 = vmatprep.subr.bf16.mxu0 0
        %494 = vmatpush1.bf16.msra.mxu0 0
        %495 = vmatprep.subr.bf16.mxu0 0
        %496 = vmatpush1.bf16.msra.mxu0 0
        %497 = vmatprep.subr.bf16.mxu0 0
        %498 = vmatpush1.bf16.msra.mxu0 0
        %499 = vmatprep.subr.bf16.mxu0 0
        %500 = vmatpush1.bf16.msra.mxu0 0
        %501 = vmatprep.mubr.bf16.mxu0 0
        %502 = vmatmul.mubr.bf16.gmra.mrb[0].mxu0 %v467
        %v503 = vpop.f32.mrb[0].mxu0
        %v504 = vadd.f32 %v330, %v503
        %v505 = vpop.f32.mrb[0].mxu0
        %v506 = vpop.f32.mrb[0].mxu0
        %v507 = vpop.f32.mrb[0].mxu0
        %508 = vdwg.mxu0
        %s509 = scalar_lea.vmem [#allocation2], 8
        %510 = vst [vmem:[%s509] sm:$0xff] %v504
        %v511 = vld [vmem:[%s278 + $0x2] sm:$0x1]
        %v512 = vld [vmem:[%s278 + $0xa] sm:$0x1]
        %v513 = vld [vmem:[%s278 + $0x12] sm:$0x1]
        %v514 = vld [vmem:[%s278 + $0x1a] sm:$0x1]
        %v515 = vld [vmem:[%s278 + $0x22] sm:$0x1]
        %v516 = vld [vmem:[%s278 + $0x2a] sm:$0x1]
        %v517 = vld [vmem:[%s278 + $0x32] sm:$0x1]
        %v518 = vld [vmem:[%s278 + $0x3a] sm:$0x1]
        %v519 = vpack.c.bf16 %v511, %v511
        %v520 = vpack.c.bf16 %v512, %v512
        %v521 = vpack.c.bf16 %v513, %v513
        %v522 = vpack.c.bf16 %v514, %v514
        %v523 = vpack.c.bf16 %v515, %v515
        %v524 = vpack.c.bf16 %v516, %v516
        %v525 = vpack.c.bf16 %v517, %v517
        %v526 = vpack.c.bf16 %v518, %v518
        %v535 = vunpack.c.l.b16 %v519
        %v536 = vunpack.c.l.b16 %v520
        %v537 = vunpack.c.l.b16 %v521
        %v538 = vunpack.c.l.b16 %v522
        %v539 = vunpack.c.l.b16 %v523
        %v540 = vunpack.c.l.b16 %v524
        %v541 = vunpack.c.l.b16 %v525
        %v542 = vunpack.c.l.b16 %v526
        %v543 = vrot.slane %v536, 7
        %v544 = vsel %vm349, %v543, %v535
        %v545 = vrot.slane %v537, 6
        %v546 = vsel %vm352, %v545, %v544
        %v547 = vrot.slane %v538, 5
        %v548 = vsel %vm355, %v547, %v546
        %v549 = vrot.slane %v539, 4
        %v550 = vsel %vm358, %v549, %v548
        %v551 = vrot.slane %v540, 3
        %v552 = vsel %vm361, %v551, %v550
        %v553 = vrot.slane %v541, 2
        %v554 = vsel %vm364, %v553, %v552
        %v555 = vrot.slane %v542, 1
        %v556 = vsel %vm367, %v555, %v554
        %v557 = vpack.c.b16 %v556, %v556
        %v559 = vsel %vm370, %v557, 0
        %561 = vmatprep.subr.bf16.mxu0 0
        %562 = vmatpush1.bf16.msra.mxu0 %v376
        %563 = vmatprep.subr.bf16.mxu0 0
        %564 = vmatpush1.bf16.msra.mxu0 0
        %565 = vmatprep.subr.bf16.mxu0 0
        %566 = vmatpush1.bf16.msra.mxu0 0
        %567 = vmatprep.subr.bf16.mxu0 0
        %568 = vmatpush1.bf16.msra.mxu0 0
        %569 = vmatprep.subr.bf16.mxu0 0
        %570 = vmatpush1.bf16.msra.mxu0 0
        %571 = vmatprep.subr.bf16.mxu0 0
        %572 = vmatpush1.bf16.msra.mxu0 0
        %573 = vmatprep.subr.bf16.mxu0 0
        %574 = vmatpush1.bf16.msra.mxu0 0
        %575 = vmatprep.subr.bf16.mxu0 0
        %576 = vmatpush1.bf16.msra.mxu0 0
        %577 = vmatprep.subr.bf16.mxu0 0
        %578 = vmatpush1.bf16.msra.mxu0 0
        %579 = vmatprep.subr.bf16.mxu0 0
        %580 = vmatpush1.bf16.msra.mxu0 0
        %581 = vmatprep.subr.bf16.mxu0 0
        %582 = vmatpush1.bf16.msra.mxu0 0
        %583 = vmatprep.subr.bf16.mxu0 0
        %584 = vmatpush1.bf16.msra.mxu0 0
        %585 = vmatprep.subr.bf16.mxu0 0
        %586 = vmatpush1.bf16.msra.mxu0 0
        %587 = vmatprep.subr.bf16.mxu0 0
        %588 = vmatpush1.bf16.msra.mxu0 0
        %589 = vmatprep.subr.bf16.mxu0 0
        %590 = vmatpush1.bf16.msra.mxu0 0
        %591 = vmatprep.subr.bf16.mxu0 0
        %592 = vmatpush1.bf16.msra.mxu0 0
        %593 = vmatprep.mubr.bf16.mxu0 0
        %594 = vmatmul.mubr.bf16.gmra.mrb[0].mxu0 %v559
        %v595 = vpop.f32.mrb[0].mxu0
        %v596 = vadd.f32 %v330, %v595
        %v597 = vpop.f32.mrb[0].mxu0
        %v598 = vpop.f32.mrb[0].mxu0
        %v599 = vpop.f32.mrb[0].mxu0
        %600 = vdwg.mxu0
        %s601 = scalar_lea.vmem [#allocation2], 16
        %602 = vst [vmem:[%s601] sm:$0xff] %v596
        %v603 = vld [vmem:[%s278 + $0x3] sm:$0x1]
        %v604 = vld [vmem:[%s278 + $0xb] sm:$0x1]
        %v605 = vld [vmem:[%s278 + $0x13] sm:$0x1]
        %v606 = vld [vmem:[%s278 + $0x1b] sm:$0x1]
        %v607 = vld [vmem:[%s278 + $0x23] sm:$0x1]
        %v608 = vld [vmem:[%s278 + $0x2b] sm:$0x1]
        %v609 = vld [vmem:[%s278 + $0x33] sm:$0x1]
        %v610 = vld [vmem:[%s278 + $0x3b] sm:$0x1]
        %v611 = vpack.c.bf16 %v603, %v603
        %v612 = vpack.c.bf16 %v604, %v604
        %v613 = vpack.c.bf16 %v605, %v605
        %v614 = vpack.c.bf16 %v606, %v606
        %v615 = vpack.c.bf16 %v607, %v607
        %v616 = vpack.c.bf16 %v608, %v608
        %v617 = vpack.c.bf16 %v609, %v609
        %v618 = vpack.c.bf16 %v610, %v610
        %v627 = vunpack.c.l.b16 %v611
        %v628 = vunpack.c.l.b16 %v612
        %v629 = vunpack.c.l.b16 %v613
        %v630 = vunpack.c.l.b16 %v614
        %v631 = vunpack.c.l.b16 %v615
        %v632 = vunpack.c.l.b16 %v616
        %v633 = vunpack.c.l.b16 %v617
        %v634 = vunpack.c.l.b16 %v618
        %v635 = vrot.slane %v628, 7
        %v636 = vsel %vm349, %v635, %v627
        %v637 = vrot.slane %v629, 6
        %v638 = vsel %vm352, %v637, %v636
        %v639 = vrot.slane %v630, 5
        %v640 = vsel %vm355, %v639, %v638
        %v641 = vrot.slane %v631, 4
        %v642 = vsel %vm358, %v641, %v640
        %v643 = vrot.slane %v632, 3
        %v644 = vsel %vm361, %v643, %v642
        %v645 = vrot.slane %v633, 2
        %v646 = vsel %vm364, %v645, %v644
        %v647 = vrot.slane %v634, 1
        %v648 = vsel %vm367, %v647, %v646
        %v649 = vpack.c.b16 %v648, %v648
        %v651 = vsel %vm370, %v649, 0
        %653 = vmatprep.subr.bf16.mxu0 0
        %654 = vmatpush1.bf16.msra.mxu0 %v376
        %655 = vmatprep.subr.bf16.mxu0 0
        %656 = vmatpush1.bf16.msra.mxu0 0
        %657 = vmatprep.subr.bf16.mxu0 0
        %658 = vmatpush1.bf16.msra.mxu0 0
        %659 = vmatprep.subr.bf16.mxu0 0
        %660 = vmatpush1.bf16.msra.mxu0 0
        %661 = vmatprep.subr.bf16.mxu0 0
        %662 = vmatpush1.bf16.msra.mxu0 0
        %663 = vmatprep.subr.bf16.mxu0 0
        %664 = vmatpush1.bf16.msra.mxu0 0
        %665 = vmatprep.subr.bf16.mxu0 0
        %666 = vmatpush1.bf16.msra.mxu0 0
        %667 = vmatprep.subr.bf16.mxu0 0
        %668 = vmatpush1.bf16.msra.mxu0 0
        %669 = vmatprep.subr.bf16.mxu0 0
        %670 = vmatpush1.bf16.msra.mxu0 0
        %671 = vmatprep.subr.bf16.mxu0 0
        %672 = vmatpush1.bf16.msra.mxu0 0
        %673 = vmatprep.subr.bf16.mxu0 0
        %674 = vmatpush1.bf16.msra.mxu0 0
        %675 = vmatprep.subr.bf16.mxu0 0
        %676 = vmatpush1.bf16.msra.mxu0 0
        %677 = vmatprep.subr.bf16.mxu0 0
        %678 = vmatpush1.bf16.msra.mxu0 0
        %679 = vmatprep.subr.bf16.mxu0 0
        %680 = vmatpush1.bf16.msra.mxu0 0
        %681 = vmatprep.subr.bf16.mxu0 0
        %682 = vmatpush1.bf16.msra.mxu0 0
        %683 = vmatprep.subr.bf16.mxu0 0
        %684 = vmatpush1.bf16.msra.mxu0 0
        %685 = vmatprep.mubr.bf16.mxu0 0
        %686 = vmatmul.mubr.bf16.gmra.mrb[0].mxu0 %v651
        %v687 = vpop.f32.mrb[0].mxu0
        %v688 = vadd.f32 %v330, %v687
        %v689 = vpop.f32.mrb[0].mxu0
        %v690 = vpop.f32.mrb[0].mxu0
        %v691 = vpop.f32.mrb[0].mxu0
        %692 = vdwg.mxu0
        %s693 = scalar_lea.vmem [#allocation2], 24
        %694 = vst [vmem:[%s693] sm:$0xff] %v688
        %v695 = vld [vmem:[%s278 + $0x4] sm:$0x1]
        %v696 = vld [vmem:[%s278 + $0xc] sm:$0x1]
        %v697 = vld [vmem:[%s278 + $0x14] sm:$0x1]
        %v698 = vld [vmem:[%s278 + $0x1c] sm:$0x1]
        %v699 = vld [vmem:[%s278 + $0x24] sm:$0x1]
        %v700 = vld [vmem:[%s278 + $0x2c] sm:$0x1]
        %v701 = vld [vmem:[%s278 + $0x34] sm:$0x1]
        %v702 = vld [vmem:[%s278 + $0x3c] sm:$0x1]
        %v703 = vpack.c.bf16 %v695, %v695
        %v704 = vpack.c.bf16 %v696, %v696
        %v705 = vpack.c.bf16 %v697, %v697
        %v706 = vpack.c.bf16 %v698, %v698
        %v707 = vpack.c.bf16 %v699, %v699
        %v708 = vpack.c.bf16 %v700, %v700
        %v709 = vpack.c.bf16 %v701, %v701
        %v710 = vpack.c.bf16 %v702, %v702
        %v719 = vunpack.c.l.b16 %v703
        %v720 = vunpack.c.l.b16 %v704
        %v721 = vunpack.c.l.b16 %v705
        %v722 = vunpack.c.l.b16 %v706
        %v723 = vunpack.c.l.b16 %v707
        %v724 = vunpack.c.l.b16 %v708
        %v725 = vunpack.c.l.b16 %v709
        %v726 = vunpack.c.l.b16 %v710
        %v727 = vrot.slane %v720, 7
        %v728 = vsel %vm349, %v727, %v719
        %v729 = vrot.slane %v721, 6
        %v730 = vsel %vm352, %v729, %v728
        %v731 = vrot.slane %v722, 5
        %v732 = vsel %vm355, %v731, %v730
        %v733 = vrot.slane %v723, 4
        %v734 = vsel %vm358, %v733, %v732
        %v735 = vrot.slane %v724, 3
        %v736 = vsel %vm361, %v735, %v734
        %v737 = vrot.slane %v725, 2
        %v738 = vsel %vm364, %v737, %v736
        %v739 = vrot.slane %v726, 1
        %v740 = vsel %vm367, %v739, %v738
        %v741 = vpack.c.b16 %v740, %v740
        %v743 = vsel %vm370, %v741, 0
        %745 = vmatprep.subr.bf16.mxu0 0
        %746 = vmatpush1.bf16.msra.mxu0 %v376
        %747 = vmatprep.subr.bf16.mxu0 0
        %748 = vmatpush1.bf16.msra.mxu0 0
        %749 = vmatprep.subr.bf16.mxu0 0
        %750 = vmatpush1.bf16.msra.mxu0 0
        %751 = vmatprep.subr.bf16.mxu0 0
        %752 = vmatpush1.bf16.msra.mxu0 0
        %753 = vmatprep.subr.bf16.mxu0 0
        %754 = vmatpush1.bf16.msra.mxu0 0
        %755 = vmatprep.subr.bf16.mxu0 0
        %756 = vmatpush1.bf16.msra.mxu0 0
        %757 = vmatprep.subr.bf16.mxu0 0
        %758 = vmatpush1.bf16.msra.mxu0 0
        %759 = vmatprep.subr.bf16.mxu0 0
        %760 = vmatpush1.bf16.msra.mxu0 0
        %761 = vmatprep.subr.bf16.mxu0 0
        %762 = vmatpush1.bf16.msra.mxu0 0
        %763 = vmatprep.subr.bf16.mxu0 0
        %764 = vmatpush1.bf16.msra.mxu0 0
        %765 = vmatprep.subr.bf16.mxu0 0
        %766 = vmatpush1.bf16.msra.mxu0 0
        %767 = vmatprep.subr.bf16.mxu0 0
        %768 = vmatpush1.bf16.msra.mxu0 0
        %769 = vmatprep.subr.bf16.mxu0 0
        %770 = vmatpush1.bf16.msra.mxu0 0
        %771 = vmatprep.subr.bf16.mxu0 0
        %772 = vmatpush1.bf16.msra.mxu0 0
        %773 = vmatprep.subr.bf16.mxu0 0
        %774 = vmatpush1.bf16.msra.mxu0 0
        %775 = vmatprep.subr.bf16.mxu0 0
        %776 = vmatpush1.bf16.msra.mxu0 0
        %777 = vmatprep.mubr.bf16.mxu0 0
        %778 = vmatmul.mubr.bf16.gmra.mrb[0].mxu0 %v743
        %v779 = vpop.f32.mrb[0].mxu0
        %v780 = vadd.f32 %v330, %v779
        %v781 = vpop.f32.mrb[0].mxu0
        %v782 = vpop.f32.mrb[0].mxu0
        %v783 = vpop.f32.mrb[0].mxu0
        %784 = vdwg.mxu0
        %s785 = scalar_lea.vmem [#allocation2], 32
        %786 = vst [vmem:[%s785] sm:$0xff] %v780
        %v787 = vld [vmem:[%s278 + $0x5] sm:$0x1]
        %v788 = vld [vmem:[%s278 + $0xd] sm:$0x1]
        %v789 = vld [vmem:[%s278 + $0x15] sm:$0x1]
        %v790 = vld [vmem:[%s278 + $0x1d] sm:$0x1]
        %v791 = vld [vmem:[%s278 + $0x25] sm:$0x1]
        %v792 = vld [vmem:[%s278 + $0x2d] sm:$0x1]
        %v793 = vld [vmem:[%s278 + $0x35] sm:$0x1]
        %v794 = vld [vmem:[%s278 + $0x3d] sm:$0x1]
        %v795 = vpack.c.bf16 %v787, %v787
        %v796 = vpack.c.bf16 %v788, %v788
        %v797 = vpack.c.bf16 %v789, %v789
        %v798 = vpack.c.bf16 %v790, %v790
        %v799 = vpack.c.bf16 %v791, %v791
        %v800 = vpack.c.bf16 %v792, %v792
        %v801 = vpack.c.bf16 %v793, %v793
        %v802 = vpack.c.bf16 %v794, %v794
        %v811 = vunpack.c.l.b16 %v795
        %v812 = vunpack.c.l.b16 %v796
        %v813 = vunpack.c.l.b16 %v797
        %v814 = vunpack.c.l.b16 %v798
        %v815 = vunpack.c.l.b16 %v799
        %v816 = vunpack.c.l.b16 %v800
        %v817 = vunpack.c.l.b16 %v801
        %v818 = vunpack.c.l.b16 %v802
        %v819 = vrot.slane %v812, 7
        %v820 = vsel %vm349, %v819, %v811
        %v821 = vrot.slane %v813, 6
        %v822 = vsel %vm352, %v821, %v820
        %v823 = vrot.slane %v814, 5
        %v824 = vsel %vm355, %v823, %v822
        %v825 = vrot.slane %v815, 4
        %v826 = vsel %vm358, %v825, %v824
        %v827 = vrot.slane %v816, 3
        %v828 = vsel %vm361, %v827, %v826
        %v829 = vrot.slane %v817, 2
        %v830 = vsel %vm364, %v829, %v828
        %v831 = vrot.slane %v818, 1
        %v832 = vsel %vm367, %v831, %v830
        %v833 = vpack.c.b16 %v832, %v832
        %v835 = vsel %vm370, %v833, 0
        %837 = vmatprep.subr.bf16.mxu0 0
        %838 = vmatpush1.bf16.msra.mxu0 %v376
        %839 = vmatprep.subr.bf16.mxu0 0
        %840 = vmatpush1.bf16.msra.mxu0 0
        %841 = vmatprep.subr.bf16.mxu0 0
        %842 = vmatpush1.bf16.msra.mxu0 0
        %843 = vmatprep.subr.bf16.mxu0 0
        %844 = vmatpush1.bf16.msra.mxu0 0
        %845 = vmatprep.subr.bf16.mxu0 0
        %846 = vmatpush1.bf16.msra.mxu0 0
        %847 = vmatprep.subr.bf16.mxu0 0
        %848 = vmatpush1.bf16.msra.mxu0 0
        %849 = vmatprep.subr.bf16.mxu0 0
        %850 = vmatpush1.bf16.msra.mxu0 0
        %851 = vmatprep.subr.bf16.mxu0 0
        %852 = vmatpush1.bf16.msra.mxu0 0
        %853 = vmatprep.subr.bf16.mxu0 0
        %854 = vmatpush1.bf16.msra.mxu0 0
        %855 = vmatprep.subr.bf16.mxu0 0
        %856 = vmatpush1.bf16.msra.mxu0 0
        %857 = vmatprep.subr.bf16.mxu0 0
        %858 = vmatpush1.bf16.msra.mxu0 0
        %859 = vmatprep.subr.bf16.mxu0 0
        %860 = vmatpush1.bf16.msra.mxu0 0
        %861 = vmatprep.subr.bf16.mxu0 0
        %862 = vmatpush1.bf16.msra.mxu0 0
        %863 = vmatprep.subr.bf16.mxu0 0
        %864 = vmatpush1.bf16.msra.mxu0 0
        %865 = vmatprep.subr.bf16.mxu0 0
        %866 = vmatpush1.bf16.msra.mxu0 0
        %867 = vmatprep.subr.bf16.mxu0 0
        %868 = vmatpush1.bf16.msra.mxu0 0
        %869 = vmatprep.mubr.bf16.mxu0 0
        %870 = vmatmul.mubr.bf16.gmra.mrb[0].mxu0 %v835
        %v871 = vpop.f32.mrb[0].mxu0
        %v872 = vadd.f32 %v330, %v871
        %v873 = vpop.f32.mrb[0].mxu0
        %v874 = vpop.f32.mrb[0].mxu0
        %v875 = vpop.f32.mrb[0].mxu0
        %876 = vdwg.mxu0
        %s877 = scalar_lea.vmem [#allocation2], 40
        %878 = vst [vmem:[%s877] sm:$0xff] %v872
        %v879 = vld [vmem:[%s278 + $0x6] sm:$0x1]
        %v880 = vld [vmem:[%s278 + $0xe] sm:$0x1]
        %v881 = vld [vmem:[%s278 + $0x16] sm:$0x1]
        %v882 = vld [vmem:[%s278 + $0x1e] sm:$0x1]
        %v883 = vld [vmem:[%s278 + $0x26] sm:$0x1]
        %v884 = vld [vmem:[%s278 + $0x2e] sm:$0x1]
        %v885 = vld [vmem:[%s278 + $0x36] sm:$0x1]
        %v886 = vld [vmem:[%s278 + $0x3e] sm:$0x1]
        %v887 = vpack.c.bf16 %v879, %v879
        %v888 = vpack.c.bf16 %v880, %v880
        %v889 = vpack.c.bf16 %v881, %v881
        %v890 = vpack.c.bf16 %v882, %v882
        %v891 = vpack.c.bf16 %v883, %v883
        %v892 = vpack.c.bf16 %v884, %v884
        %v893 = vpack.c.bf16 %v885, %v885
        %v894 = vpack.c.bf16 %v886, %v886
        %v903 = vunpack.c.l.b16 %v887
        %v904 = vunpack.c.l.b16 %v888
        %v905 = vunpack.c.l.b16 %v889
        %v906 = vunpack.c.l.b16 %v890
        %v907 = vunpack.c.l.b16 %v891
        %v908 = vunpack.c.l.b16 %v892
        %v909 = vunpack.c.l.b16 %v893
        %v910 = vunpack.c.l.b16 %v894
        %v911 = vrot.slane %v904, 7
        %v912 = vsel %vm349, %v911, %v903
        %v913 = vrot.slane %v905, 6
        %v914 = vsel %vm352, %v913, %v912
        %v915 = vrot.slane %v906, 5
        %v916 = vsel %vm355, %v915, %v914
        %v917 = vrot.slane %v907, 4
        %v918 = vsel %vm358, %v917, %v916
        %v919 = vrot.slane %v908, 3
        %v920 = vsel %vm361, %v919, %v918
        %v921 = vrot.slane %v909, 2
        %v922 = vsel %vm364, %v921, %v920
        %v923 = vrot.slane %v910, 1
        %v924 = vsel %vm367, %v923, %v922
        %v925 = vpack.c.b16 %v924, %v924
        %v927 = vsel %vm370, %v925, 0
        %929 = vmatprep.subr.bf16.mxu0 0
        %930 = vmatpush1.bf16.msra.mxu0 %v376
        %931 = vmatprep.subr.bf16.mxu0 0
        %932 = vmatpush1.bf16.msra.mxu0 0
        %933 = vmatprep.subr.bf16.mxu0 0
        %934 = vmatpush1.bf16.msra.mxu0 0
        %935 = vmatprep.subr.bf16.mxu0 0
        %936 = vmatpush1.bf16.msra.mxu0 0
        %937 = vmatprep.subr.bf16.mxu0 0
        %938 = vmatpush1.bf16.msra.mxu0 0
        %939 = vmatprep.subr.bf16.mxu0 0
        %940 = vmatpush1.bf16.msra.mxu0 0
        %941 = vmatprep.subr.bf16.mxu0 0
        %942 = vmatpush1.bf16.msra.mxu0 0
        %943 = vmatprep.subr.bf16.mxu0 0
        %944 = vmatpush1.bf16.msra.mxu0 0
        %945 = vmatprep.subr.bf16.mxu0 0
        %946 = vmatpush1.bf16.msra.mxu0 0
        %947 = vmatprep.subr.bf16.mxu0 0
        %948 = vmatpush1.bf16.msra.mxu0 0
        %949 = vmatprep.subr.bf16.mxu0 0
        %950 = vmatpush1.bf16.msra.mxu0 0
        %951 = vmatprep.subr.bf16.mxu0 0
        %952 = vmatpush1.bf16.msra.mxu0 0
        %953 = vmatprep.subr.bf16.mxu0 0
        %954 = vmatpush1.bf16.msra.mxu0 0
        %955 = vmatprep.subr.bf16.mxu0 0
        %956 = vmatpush1.bf16.msra.mxu0 0
        %957 = vmatprep.subr.bf16.mxu0 0
        %958 = vmatpush1.bf16.msra.mxu0 0
        %959 = vmatprep.subr.bf16.mxu0 0
        %960 = vmatpush1.bf16.msra.mxu0 0
        %961 = vmatprep.mubr.bf16.mxu0 0
        %962 = vmatmul.mubr.bf16.gmra.mrb[0].mxu0 %v927
        %v963 = vpop.f32.mrb[0].mxu0
        %v964 = vadd.f32 %v330, %v963
        %v965 = vpop.f32.mrb[0].mxu0
        %v966 = vpop.f32.mrb[0].mxu0
        %v967 = vpop.f32.mrb[0].mxu0
        %968 = vdwg.mxu0
        %s969 = scalar_lea.vmem [#allocation2], 48
        %970 = vst [vmem:[%s969] sm:$0xff] %v964
        %v971 = vld [vmem:[%s278 + $0x7] sm:$0x1]
        %v972 = vld [vmem:[%s278 + $0xf] sm:$0x1]
        %v973 = vld [vmem:[%s278 + $0x17] sm:$0x1]
        %v974 = vld [vmem:[%s278 + $0x1f] sm:$0x1]
        %v975 = vld [vmem:[%s278 + $0x27] sm:$0x1]
        %v976 = vld [vmem:[%s278 + $0x2f] sm:$0x1]
        %v977 = vld [vmem:[%s278 + $0x37] sm:$0x1]
        %v978 = vld [vmem:[%s278 + $0x3f] sm:$0x1]
        %v979 = vpack.c.bf16 %v971, %v971
        %v980 = vpack.c.bf16 %v972, %v972
        %v981 = vpack.c.bf16 %v973, %v973
        %v982 = vpack.c.bf16 %v974, %v974
        %v983 = vpack.c.bf16 %v975, %v975
        %v984 = vpack.c.bf16 %v976, %v976
        %v985 = vpack.c.bf16 %v977, %v977
        %v986 = vpack.c.bf16 %v978, %v978
        %v995 = vunpack.c.l.b16 %v979
        %v996 = vunpack.c.l.b16 %v980
        %v997 = vunpack.c.l.b16 %v981
        %v998 = vunpack.c.l.b16 %v982
        %v999 = vunpack.c.l.b16 %v983
        %v1000 = vunpack.c.l.b16 %v984
        %v1001 = vunpack.c.l.b16 %v985
        %v1002 = vunpack.c.l.b16 %v986
        %v1003 = vrot.slane %v996, 7
        %v1004 = vsel %vm349, %v1003, %v995
        %v1005 = vrot.slane %v997, 6
        %v1006 = vsel %vm352, %v1005, %v1004
        %v1007 = vrot.slane %v998, 5
        %v1008 = vsel %vm355, %v1007, %v1006
        %v1009 = vrot.slane %v999, 4
        %v1010 = vsel %vm358, %v1009, %v1008
        %v1011 = vrot.slane %v1000, 3
        %v1012 = vsel %vm361, %v1011, %v1010
        %v1013 = vrot.slane %v1001, 2
        %v1014 = vsel %vm364, %v1013, %v1012
        %v1015 = vrot.slane %v1002, 1
        %v1016 = vsel %vm367, %v1015, %v1014
        %v1017 = vpack.c.b16 %v1016, %v1016
        %v1019 = vsel %vm370, %v1017, 0
        %1021 = vmatprep.subr.bf16.mxu0 0
        %1022 = vmatpush1.bf16.msra.mxu0 %v376
        %1023 = vmatprep.subr.bf16.mxu0 0
        %1024 = vmatpush1.bf16.msra.mxu0 0
        %1025 = vmatprep.subr.bf16.mxu0 0
        %1026 = vmatpush1.bf16.msra.mxu0 0
        %1027 = vmatprep.subr.bf16.mxu0 0
        %1028 = vmatpush1.bf16.msra.mxu0 0
        %1029 = vmatprep.subr.bf16.mxu0 0
        %1030 = vmatpush1.bf16.msra.mxu0 0
        %1031 = vmatprep.subr.bf16.mxu0 0
        %1032 = vmatpush1.bf16.msra.mxu0 0
        %1033 = vmatprep.subr.bf16.mxu0 0
        %1034 = vmatpush1.bf16.msra.mxu0 0
        %1035 = vmatprep.subr.bf16.mxu0 0
        %1036 = vmatpush1.bf16.msra.mxu0 0
        %1037 = vmatprep.subr.bf16.mxu0 0
        %1038 = vmatpush1.bf16.msra.mxu0 0
        %1039 = vmatprep.subr.bf16.mxu0 0
        %1040 = vmatpush1.bf16.msra.mxu0 0
        %1041 = vmatprep.subr.bf16.mxu0 0
        %1042 = vmatpush1.bf16.msra.mxu0 0
        %1043 = vmatprep.subr.bf16.mxu0 0
        %1044 = vmatpush1.bf16.msra.mxu0 0
        %1045 = vmatprep.subr.bf16.mxu0 0
        %1046 = vmatpush1.bf16.msra.mxu0 0
        %1047 = vmatprep.subr.bf16.mxu0 0
        %1048 = vmatpush1.bf16.msra.mxu0 0
        %1049 = vmatprep.subr.bf16.mxu0 0
        %1050 = vmatpush1.bf16.msra.mxu0 0
        %1051 = vmatprep.subr.bf16.mxu0 0
        %1052 = vmatpush1.bf16.msra.mxu0 0
        %1053 = vmatprep.mubr.bf16.mxu0 0
        %1054 = vmatmul.mubr.bf16.gmra.mrb[0].mxu0 %v1019
        %v1055 = vpop.f32.mrb[0].mxu0
        %v1056 = vadd.f32 %v330, %v1055
        %v1057 = vpop.f32.mrb[0].mxu0
        %v1058 = vpop.f32.mrb[0].mxu0
        %v1059 = vpop.f32.mrb[0].mxu0
        %1060 = vdwg.mxu0
        %s1061 = scalar_lea.vmem [#allocation2], 56
        %1062 = vst [vmem:[%s1061] sm:$0xff] %v1056
        %v1063 = vld [vmem:[#allocation3] sm:$0xff]
        %v1064 = vld [vmem:[#allocation4] sm:$0xff]
        %v1065 = vld [vmem:[#allocation2] sm:$0xff]
        %v1066 = vpack.c.bf16 %v1063, %v1063
        %v1067 = vld [vmem:[%s2] sm:$0xf]
        %v1068 = vld [vmem:[%s2 + $0x4] sm:$0xf]
        %v1069 = vld [vmem:[%s2 + $0x8] sm:$0xf]
        %v1070 = vld [vmem:[%s2 + $0xc] sm:$0xf]
        %v1075 = vunpack.c.l.b16 %v1067
        %v1076 = vunpack.c.l.b16 %v1068
        %v1077 = vunpack.c.l.b16 %v1069
        %v1078 = vunpack.c.l.b16 %v1070
        %v1079 = vpack.c.b16 %v1076, %v1075
        %v1080 = vpack.c.b16 %v1078, %v1077
        %vm1083 = vcmask 261120
        %v1085 = vsel %vm1083, %v1066, 0
        %1087 = vmatprep.subr.bf16.mxu0 0
        %1088 = vmatpush1.bf16.msra.mxu0 %v1079
        %1089 = vmatprep.subr.bf16.mxu0 0
        %1090 = vmatpush1.bf16.msra.mxu0 %v1080
        %1091 = vmatprep.subr.bf16.mxu0 0
        %1092 = vmatpush1.bf16.msra.mxu0 0
        %1093 = vmatprep.subr.bf16.mxu0 0
        %1094 = vmatpush1.bf16.msra.mxu0 0
        %1095 = vmatprep.subr.bf16.mxu0 0
        %1096 = vmatpush1.bf16.msra.mxu0 0
        %1097 = vmatprep.subr.bf16.mxu0 0
        %1098 = vmatpush1.bf16.msra.mxu0 0
        %1099 = vmatprep.subr.bf16.mxu0 0
        %1100 = vmatpush1.bf16.msra.mxu0 0
        %1101 = vmatprep.subr.bf16.mxu0 0
        %1102 = vmatpush1.bf16.msra.mxu0 0
        %1103 = vmatprep.subr.bf16.mxu0 0
        %1104 = vmatpush1.bf16.msra.mxu0 0
        %1105 = vmatprep.subr.bf16.mxu0 0
        %1106 = vmatpush1.bf16.msra.mxu0 0
        %1107 = vmatprep.subr.bf16.mxu0 0
        %1108 = vmatpush1.bf16.msra.mxu0 0
        %1109 = vmatprep.subr.bf16.mxu0 0
        %1110 = vmatpush1.bf16.msra.mxu0 0
        %1111 = vmatprep.subr.bf16.mxu0 0
        %1112 = vmatpush1.bf16.msra.mxu0 0
        %1113 = vmatprep.subr.bf16.mxu0 0
        %1114 = vmatpush1.bf16.msra.mxu0 0
        %1115 = vmatprep.subr.bf16.mxu0 0
        %1116 = vmatpush1.bf16.msra.mxu0 0
        %1117 = vmatprep.subr.bf16.mxu0 0
        %1118 = vmatpush1.bf16.msra.mxu0 0
        %1119 = vmatprep.mubr.bf16.mxu0 0
        %1120 = vmatmul.mubr.bf16.gmra.mrb[0].mxu0 %v1085
        %v1121 = vpop.f32.mrb[0].mxu0
        %v1122 = vadd.f32 0.0, %v1121
        %v1123 = vpop.f32.mrb[0].mxu0
        %v1124 = vpop.f32.mrb[0].mxu0
        %v1125 = vpop.f32.mrb[0].mxu0
        %1126 = vdwg.mxu0
        %v1127 = vadd.f32 %v1065, %v1122
        %v1128 = vxor.u32 %v1127, 2147483648
        %v1129 = vmul.f32 %v1128, 1.442695
        %v1130 = vpow.pop %v1129
        %v1131 = vadd.f32 %v1130, 1.0
        %v1132 = vrcp.pop %v1131
        %v1133 = vmul.f32 1.0, %v1132
        %v1134 = vtanh.pop %v1127
        %1136 = vrot.lane.b32.xlu0 %v1064, 32
        %v1137 = vpop.permute.xlu0 %1136
        %v1139 = vmul.f32 %v1133, %v1137
        %1141 = vrot.lane.b32.xlu0 %v1134, 64
        %v1142 = vpop.permute.xlu0 %1141
        %v1144 = vmul.f32 %v1133, %v1142
        %1146 = vrot.lane.b32.xlu0 %v1144, 32
        %v1147 = vpop.permute.xlu0 %1146
        %v1149 = vadd.f32 %v1139, %v1147
        %v1150 = vtanh.pop %v1149
        %1152 = vrot.lane.b32.xlu0 %v1150, 64
        %v1153 = vpop.permute.xlu0 %1152
        %v1155 = vmul.f32 %v1133, %v1153
        %v1156 = vld [vmem:[%s509] sm:$0xff]
        %v1157 = vpack.c.bf16 %v1155, %v1155
        %1159 = vrot.lane.b32.xlu0 %v1157, 32
        %v1160 = vpop.permute.xlu0 %1159
        %v1162 = vsel %vm1083, %v1160, 0
        %1164 = vmatprep.subr.bf16.mxu0 0
        %1165 = vmatpush1.bf16.msra.mxu0 %v1079
        %1166 = vmatprep.subr.bf16.mxu0 0
        %1167 = vmatpush1.bf16.msra.mxu0 %v1080
        %1168 = vmatprep.subr.bf16.mxu0 0
        %1169 = vmatpush1.bf16.msra.mxu0 0
        %1170 = vmatprep.subr.bf16.mxu0 0
        %1171 = vmatpush1.bf16.msra.mxu0 0
        %1172 = vmatprep.subr.bf16.mxu0 0
        %1173 = vmatpush1.bf16.msra.mxu0 0
        %1174 = vmatprep.subr.bf16.mxu0 0
        %1175 = vmatpush1.bf16.msra.mxu0 0
        %1176 = vmatprep.subr.bf16.mxu0 0
        %1177 = vmatpush1.bf16.msra.mxu0 0
        %1178 = vmatprep.subr.bf16.mxu0 0
        %1179 = vmatpush1.bf16.msra.mxu0 0
        %1180 = vmatprep.subr.bf16.mxu0 0
        %1181 = vmatpush1.bf16.msra.mxu0 0
        %1182 = vmatprep.subr.bf16.mxu0 0
        %1183 = vmatpush1.bf16.msra.mxu0 0
        %1184 = vmatprep.subr.bf16.mxu0 0
        %1185 = vmatpush1.bf16.msra.mxu0 0
        %1186 = vmatprep.subr.bf16.mxu0 0
        %1187 = vmatpush1.bf16.msra.mxu0 0
        %1188 = vmatprep.subr.bf16.mxu0 0
        %1189 = vmatpush1.bf16.msra.mxu0 0
        %1190 = vmatprep.subr.bf16.mxu0 0
        %1191 = vmatpush1.bf16.msra.mxu0 0
        %1192 = vmatprep.subr.bf16.mxu0 0
        %1193 = vmatpush1.bf16.msra.mxu0 0
        %1194 = vmatprep.subr.bf16.mxu0 0
        %1195 = vmatpush1.bf16.msra.mxu0 0
        %1196 = vmatprep.mubr.bf16.mxu0 0
        %1197 = vmatmul.mubr.bf16.gmra.mrb[0].mxu0 %v1162
        %v1198 = vpop.f32.mrb[0].mxu0
        %v1199 = vadd.f32 0.0, %v1198
        %v1200 = vpop.f32.mrb[0].mxu0
        %v1201 = vpop.f32.mrb[0].mxu0
        %v1202 = vpop.f32.mrb[0].mxu0
        %1203 = vdwg.mxu0
        %v1204 = vadd.f32 %v1156, %v1199
        %v1205 = vxor.u32 %v1204, 2147483648
        %v1206 = vmul.f32 %v1205, 1.442695
        %v1207 = vpow.pop %v1206
        %v1208 = vadd.f32 %v1207, 1.0
        %v1209 = vrcp.pop %v1208
        %v1210 = vmul.f32 1.0, %v1209
        %v1211 = vtanh.pop %v1204
        %v1212 = vmul.f32 %v1210, %v1149
        %1214 = vrot.lane.b32.xlu0 %v1211, 64
        %v1215 = vpop.permute.xlu0 %1214
        %v1217 = vmul.f32 %v1210, %v1215
        %1219 = vrot.lane.b32.xlu0 %v1217, 32
        %v1220 = vpop.permute.xlu0 %1219
        %v1222 = vadd.f32 %v1212, %v1220
        %v1223 = vtanh.pop %v1222
        %1225 = vrot.lane.b32.xlu0 %v1223, 64
        %v1226 = vpop.permute.xlu0 %1225
        %v1228 = vmul.f32 %v1210, %v1226
        %v1229 = vld [vmem:[%s601] sm:$0xff]
        %v1230 = vpack.c.bf16 %v1228, %v1228
        %1232 = vrot.lane.b32.xlu0 %v1230, 32
        %v1233 = vpop.permute.xlu0 %1232
        %v1235 = vsel %vm1083, %v1233, 0
        %1237 = vmatprep.subr.bf16.mxu0 0
        %1238 = vmatpush1.bf16.msra.mxu0 %v1079
        %1239 = vmatprep.subr.bf16.mxu0 0
        %1240 = vmatpush1.bf16.msra.mxu0 %v1080
        %1241 = vmatprep.subr.bf16.mxu0 0
        %1242 = vmatpush1.bf16.msra.mxu0 0
        %1243 = vmatprep.subr.bf16.mxu0 0
        %1244 = vmatpush1.bf16.msra.mxu0 0
        %1245 = vmatprep.subr.bf16.mxu0 0
        %1246 = vmatpush1.bf16.msra.mxu0 0
        %1247 = vmatprep.subr.bf16.mxu0 0
        %1248 = vmatpush1.bf16.msra.mxu0 0
        %1249 = vmatprep.subr.bf16.mxu0 0
        %1250 = vmatpush1.bf16.msra.mxu0 0
        %1251 = vmatprep.subr.bf16.mxu0 0
        %1252 = vmatpush1.bf16.msra.mxu0 0
        %1253 = vmatprep.subr.bf16.mxu0 0
        %1254 = vmatpush1.bf16.msra.mxu0 0
        %1255 = vmatprep.subr.bf16.mxu0 0
        %1256 = vmatpush1.bf16.msra.mxu0 0
        %1257 = vmatprep.subr.bf16.mxu0 0
        %1258 = vmatpush1.bf16.msra.mxu0 0
        %1259 = vmatprep.subr.bf16.mxu0 0
        %1260 = vmatpush1.bf16.msra.mxu0 0
        %1261 = vmatprep.subr.bf16.mxu0 0
        %1262 = vmatpush1.bf16.msra.mxu0 0
        %1263 = vmatprep.subr.bf16.mxu0 0
        %1264 = vmatpush1.bf16.msra.mxu0 0
        %1265 = vmatprep.subr.bf16.mxu0 0
        %1266 = vmatpush1.bf16.msra.mxu0 0
        %1267 = vmatprep.subr.bf16.mxu0 0
        %1268 = vmatpush1.bf16.msra.mxu0 0
        %1269 = vmatprep.mubr.bf16.mxu0 0
        %1270 = vmatmul.mubr.bf16.gmra.mrb[0].mxu0 %v1235
        %v1271 = vpop.f32.mrb[0].mxu0
        %v1272 = vadd.f32 0.0, %v1271
        %v1273 = vpop.f32.mrb[0].mxu0
        %v1274 = vpop.f32.mrb[0].mxu0
        %v1275 = vpop.f32.mrb[0].mxu0
        %1276 = vdwg.mxu0
        %v1277 = vadd.f32 %v1229, %v1272
        %v1278 = vxor.u32 %v1277, 2147483648
        %v1279 = vmul.f32 %v1278, 1.442695
        %v1280 = vpow.pop %v1279
        %v1281 = vadd.f32 %v1280, 1.0
        %v1282 = vrcp.pop %v1281
        %v1283 = vmul.f32 1.0, %v1282
        %v1284 = vtanh.pop %v1277
        %v1285 = vmul.f32 %v1283, %v1222
        %1287 = vrot.lane.b32.xlu0 %v1284, 64
        %v1288 = vpop.permute.xlu0 %1287
        %v1290 = vmul.f32 %v1283, %v1288
        %1292 = vrot.lane.b32.xlu0 %v1290, 32
        %v1293 = vpop.permute.xlu0 %1292
        %v1295 = vadd.f32 %v1285, %v1293
        %v1296 = vtanh.pop %v1295
        %1298 = vrot.lane.b32.xlu0 %v1296, 64
        %v1299 = vpop.permute.xlu0 %1298
        %v1301 = vmul.f32 %v1283, %v1299
        %v1302 = vld [vmem:[%s693] sm:$0xff]
        %v1303 = vpack.c.bf16 %v1301, %v1301
        %1305 = vrot.lane.b32.xlu0 %v1303, 32
        %v1306 = vpop.permute.xlu0 %1305
        %v1308 = vsel %vm1083, %v1306, 0
        %1310 = vmatprep.subr.bf16.mxu0 0
        %1311 = vmatpush1.bf16.msra.mxu0 %v1079
        %1312 = vmatprep.subr.bf16.mxu0 0
        %1313 = vmatpush1.bf16.msra.mxu0 %v1080
        %1314 = vmatprep.subr.bf16.mxu0 0
        %1315 = vmatpush1.bf16.msra.mxu0 0
        %1316 = vmatprep.subr.bf16.mxu0 0
        %1317 = vmatpush1.bf16.msra.mxu0 0
        %1318 = vmatprep.subr.bf16.mxu0 0
        %1319 = vmatpush1.bf16.msra.mxu0 0
        %1320 = vmatprep.subr.bf16.mxu0 0
        %1321 = vmatpush1.bf16.msra.mxu0 0
        %1322 = vmatprep.subr.bf16.mxu0 0
        %1323 = vmatpush1.bf16.msra.mxu0 0
        %1324 = vmatprep.subr.bf16.mxu0 0
        %1325 = vmatpush1.bf16.msra.mxu0 0
        %1326 = vmatprep.subr.bf16.mxu0 0
        %1327 = vmatpush1.bf16.msra.mxu0 0
        %1328 = vmatprep.subr.bf16.mxu0 0
        %1329 = vmatpush1.bf16.msra.mxu0 0
        %1330 = vmatprep.subr.bf16.mxu0 0
        %1331 = vmatpush1.bf16.msra.mxu0 0
        %1332 = vmatprep.subr.bf16.mxu0 0
        %1333 = vmatpush1.bf16.msra.mxu0 0
        %1334 = vmatprep.subr.bf16.mxu0 0
        %1335 = vmatpush1.bf16.msra.mxu0 0
        %1336 = vmatprep.subr.bf16.mxu0 0
        %1337 = vmatpush1.bf16.msra.mxu0 0
        %1338 = vmatprep.subr.bf16.mxu0 0
        %1339 = vmatpush1.bf16.msra.mxu0 0
        %1340 = vmatprep.subr.bf16.mxu0 0
        %1341 = vmatpush1.bf16.msra.mxu0 0
        %1342 = vmatprep.mubr.bf16.mxu0 0
        %1343 = vmatmul.mubr.bf16.gmra.mrb[0].mxu0 %v1308
        %v1344 = vpop.f32.mrb[0].mxu0
        %v1345 = vadd.f32 0.0, %v1344
        %v1346 = vpop.f32.mrb[0].mxu0
        %v1347 = vpop.f32.mrb[0].mxu0
        %v1348 = vpop.f32.mrb[0].mxu0
        %1349 = vdwg.mxu0
        %v1350 = vadd.f32 %v1302, %v1345
        %v1351 = vxor.u32 %v1350, 2147483648
        %v1352 = vmul.f32 %v1351, 1.442695
        %v1353 = vpow.pop %v1352
        %v1354 = vadd.f32 %v1353, 1.0
        %v1355 = vrcp.pop %v1354
        %v1356 = vmul.f32 1.0, %v1355
        %v1357 = vtanh.pop %v1350
        %v1358 = vmul.f32 %v1356, %v1295
        %1360 = vrot.lane.b32.xlu0 %v1357, 64
        %v1361 = vpop.permute.xlu0 %1360
        %v1363 = vmul.f32 %v1356, %v1361
        %1365 = vrot.lane.b32.xlu0 %v1363, 32
        %v1366 = vpop.permute.xlu0 %1365
        %v1368 = vadd.f32 %v1358, %v1366
        %v1369 = vtanh.pop %v1368
        %1371 = vrot.lane.b32.xlu0 %v1369, 64
        %v1372 = vpop.permute.xlu0 %1371
        %v1374 = vmul.f32 %v1356, %v1372
        %v1375 = vld [vmem:[%s785] sm:$0xff]
        %v1376 = vpack.c.bf16 %v1374, %v1374
        %1378 = vrot.lane.b32.xlu0 %v1376, 32
        %v1379 = vpop.permute.xlu0 %1378
        %v1381 = vsel %vm1083, %v1379, 0
        %1383 = vmatprep.subr.bf16.mxu0 0
        %1384 = vmatpush1.bf16.msra.mxu0 %v1079
        %1385 = vmatprep.subr.bf16.mxu0 0
        %1386 = vmatpush1.bf16.msra.mxu0 %v1080
        %1387 = vmatprep.subr.bf16.mxu0 0
        %1388 = vmatpush1.bf16.msra.mxu0 0
        %1389 = vmatprep.subr.bf16.mxu0 0
        %1390 = vmatpush1.bf16.msra.mxu0 0
        %1391 = vmatprep.subr.bf16.mxu0 0
        %1392 = vmatpush1.bf16.msra.mxu0 0
        %1393 = vmatprep.subr.bf16.mxu0 0
        %1394 = vmatpush1.bf16.msra.mxu0 0
        %1395 = vmatprep.subr.bf16.mxu0 0
        %1396 = vmatpush1.bf16.msra.mxu0 0
        %1397 = vmatprep.subr.bf16.mxu0 0
        %1398 = vmatpush1.bf16.msra.mxu0 0
        %1399 = vmatprep.subr.bf16.mxu0 0
        %1400 = vmatpush1.bf16.msra.mxu0 0
        %1401 = vmatprep.subr.bf16.mxu0 0
        %1402 = vmatpush1.bf16.msra.mxu0 0
        %1403 = vmatprep.subr.bf16.mxu0 0
        %1404 = vmatpush1.bf16.msra.mxu0 0
        %1405 = vmatprep.subr.bf16.mxu0 0
        %1406 = vmatpush1.bf16.msra.mxu0 0
        %1407 = vmatprep.subr.bf16.mxu0 0
        %1408 = vmatpush1.bf16.msra.mxu0 0
        %1409 = vmatprep.subr.bf16.mxu0 0
        %1410 = vmatpush1.bf16.msra.mxu0 0
        %1411 = vmatprep.subr.bf16.mxu0 0
        %1412 = vmatpush1.bf16.msra.mxu0 0
        %1413 = vmatprep.subr.bf16.mxu0 0
        %1414 = vmatpush1.bf16.msra.mxu0 0
        %1415 = vmatprep.mubr.bf16.mxu0 0
        %1416 = vmatmul.mubr.bf16.gmra.mrb[0].mxu0 %v1381
        %v1417 = vpop.f32.mrb[0].mxu0
        %v1418 = vadd.f32 0.0, %v1417
        %v1419 = vpop.f32.mrb[0].mxu0
        %v1420 = vpop.f32.mrb[0].mxu0
        %v1421 = vpop.f32.mrb[0].mxu0
        %1422 = vdwg.mxu0
        %v1423 = vadd.f32 %v1375, %v1418
        %v1424 = vxor.u32 %v1423, 2147483648
        %v1425 = vmul.f32 %v1424, 1.442695
        %v1426 = vpow.pop %v1425
        %v1427 = vadd.f32 %v1426, 1.0
        %v1428 = vrcp.pop %v1427
        %v1429 = vmul.f32 1.0, %v1428
        %v1430 = vtanh.pop %v1423
        %v1431 = vmul.f32 %v1429, %v1368
        %1433 = vrot.lane.b32.xlu0 %v1430, 64
        %v1434 = vpop.permute.xlu0 %1433
        %v1436 = vmul.f32 %v1429, %v1434
        %1438 = vrot.lane.b32.xlu0 %v1436, 32
        %v1439 = vpop.permute.xlu0 %1438
        %v1441 = vadd.f32 %v1431, %v1439
        %v1442 = vtanh.pop %v1441
        %1444 = vrot.lane.b32.xlu0 %v1442, 64
        %v1445 = vpop.permute.xlu0 %1444
        %v1447 = vmul.f32 %v1429, %v1445
        %v1448 = vld [vmem:[%s877] sm:$0xff]
        %v1449 = vpack.c.bf16 %v1447, %v1447
        %1451 = vrot.lane.b32.xlu0 %v1449, 32
        %v1452 = vpop.permute.xlu0 %1451
        %v1454 = vsel %vm1083, %v1452, 0
        %1456 = vmatprep.subr.bf16.mxu0 0
        %1457 = vmatpush1.bf16.msra.mxu0 %v1079
        %1458 = vmatprep.subr.bf16.mxu0 0
        %1459 = vmatpush1.bf16.msra.mxu0 %v1080
        %1460 = vmatprep.subr.bf16.mxu0 0
        %1461 = vmatpush1.bf16.msra.mxu0 0
        %1462 = vmatprep.subr.bf16.mxu0 0
        %1463 = vmatpush1.bf16.msra.mxu0 0
        %1464 = vmatprep.subr.bf16.mxu0 0
        %1465 = vmatpush1.bf16.msra.mxu0 0
        %1466 = vmatprep.subr.bf16.mxu0 0
        %1467 = vmatpush1.bf16.msra.mxu0 0
        %1468 = vmatprep.subr.bf16.mxu0 0
        %1469 = vmatpush1.bf16.msra.mxu0 0
        %1470 = vmatprep.subr.bf16.mxu0 0
        %1471 = vmatpush1.bf16.msra.mxu0 0
        %1472 = vmatprep.subr.bf16.mxu0 0
        %1473 = vmatpush1.bf16.msra.mxu0 0
        %1474 = vmatprep.subr.bf16.mxu0 0
        %1475 = vmatpush1.bf16.msra.mxu0 0
        %1476 = vmatprep.subr.bf16.mxu0 0
        %1477 = vmatpush1.bf16.msra.mxu0 0
        %1478 = vmatprep.subr.bf16.mxu0 0
        %1479 = vmatpush1.bf16.msra.mxu0 0
        %1480 = vmatprep.subr.bf16.mxu0 0
        %1481 = vmatpush1.bf16.msra.mxu0 0
        %1482 = vmatprep.subr.bf16.mxu0 0
        %1483 = vmatpush1.bf16.msra.mxu0 0
        %1484 = vmatprep.subr.bf16.mxu0 0
        %1485 = vmatpush1.bf16.msra.mxu0 0
        %1486 = vmatprep.subr.bf16.mxu0 0
        %1487 = vmatpush1.bf16.msra.mxu0 0
        %1488 = vmatprep.mubr.bf16.mxu0 0
        %1489 = vmatmul.mubr.bf16.gmra.mrb[0].mxu0 %v1454
        %v1490 = vpop.f32.mrb[0].mxu0
        %v1491 = vadd.f32 0.0, %v1490
        %v1492 = vpop.f32.mrb[0].mxu0
        %v1493 = vpop.f32.mrb[0].mxu0
        %v1494 = vpop.f32.mrb[0].mxu0
        %1495 = vdwg.mxu0
        %v1496 = vadd.f32 %v1448, %v1491
        %v1497 = vxor.u32 %v1496, 2147483648
        %v1498 = vmul.f32 %v1497, 1.442695
        %v1499 = vpow.pop %v1498
        %v1500 = vadd.f32 %v1499, 1.0
        %v1501 = vrcp.pop %v1500
        %v1502 = vmul.f32 1.0, %v1501
        %v1503 = vtanh.pop %v1496
        %v1504 = vmul.f32 %v1502, %v1441
        %1506 = vrot.lane.b32.xlu0 %v1503, 64
        %v1507 = vpop.permute.xlu0 %1506
        %v1509 = vmul.f32 %v1502, %v1507
        %1511 = vrot.lane.b32.xlu0 %v1509, 32
        %v1512 = vpop.permute.xlu0 %1511
        %v1514 = vadd.f32 %v1504, %v1512
        %v1515 = vtanh.pop %v1514
        %1517 = vrot.lane.b32.xlu0 %v1515, 64
        %v1518 = vpop.permute.xlu0 %1517
        %v1520 = vmul.f32 %v1502, %v1518
        %v1521 = vld [vmem:[%s969] sm:$0xff]
        %v1522 = vpack.c.bf16 %v1520, %v1520
        %1524 = vrot.lane.b32.xlu0 %v1522, 32
        %v1525 = vpop.permute.xlu0 %1524
        %v1527 = vsel %vm1083, %v1525, 0
        %1529 = vmatprep.subr.bf16.mxu0 0
        %1530 = vmatpush1.bf16.msra.mxu0 %v1079
        %1531 = vmatprep.subr.bf16.mxu0 0
        %1532 = vmatpush1.bf16.msra.mxu0 %v1080
        %1533 = vmatprep.subr.bf16.mxu0 0
        %1534 = vmatpush1.bf16.msra.mxu0 0
        %1535 = vmatprep.subr.bf16.mxu0 0
        %1536 = vmatpush1.bf16.msra.mxu0 0
        %1537 = vmatprep.subr.bf16.mxu0 0
        %1538 = vmatpush1.bf16.msra.mxu0 0
        %1539 = vmatprep.subr.bf16.mxu0 0
        %1540 = vmatpush1.bf16.msra.mxu0 0
        %1541 = vmatprep.subr.bf16.mxu0 0
        %1542 = vmatpush1.bf16.msra.mxu0 0
        %1543 = vmatprep.subr.bf16.mxu0 0
        %1544 = vmatpush1.bf16.msra.mxu0 0
        %1545 = vmatprep.subr.bf16.mxu0 0
        %1546 = vmatpush1.bf16.msra.mxu0 0
        %1547 = vmatprep.subr.bf16.mxu0 0
        %1548 = vmatpush1.bf16.msra.mxu0 0
        %1549 = vmatprep.subr.bf16.mxu0 0
        %1550 = vmatpush1.bf16.msra.mxu0 0
        %1551 = vmatprep.subr.bf16.mxu0 0
        %1552 = vmatpush1.bf16.msra.mxu0 0
        %1553 = vmatprep.subr.bf16.mxu0 0
        %1554 = vmatpush1.bf16.msra.mxu0 0
        %1555 = vmatprep.subr.bf16.mxu0 0
        %1556 = vmatpush1.bf16.msra.mxu0 0
        %1557 = vmatprep.subr.bf16.mxu0 0
        %1558 = vmatpush1.bf16.msra.mxu0 0
        %1559 = vmatprep.subr.bf16.mxu0 0
        %1560 = vmatpush1.bf16.msra.mxu0 0
        %1561 = vmatprep.mubr.bf16.mxu0 0
        %1562 = vmatmul.mubr.bf16.gmra.mrb[0].mxu0 %v1527
        %v1563 = vpop.f32.mrb[0].mxu0
        %v1564 = vadd.f32 0.0, %v1563
        %v1565 = vpop.f32.mrb[0].mxu0
        %v1566 = vpop.f32.mrb[0].mxu0
        %v1567 = vpop.f32.mrb[0].mxu0
        %1568 = vdwg.mxu0
        %v1569 = vadd.f32 %v1521, %v1564
        %v1570 = vxor.u32 %v1569, 2147483648
        %v1571 = vmul.f32 %v1570, 1.442695
        %v1572 = vpow.pop %v1571
        %v1573 = vadd.f32 %v1572, 1.0
        %v1574 = vrcp.pop %v1573
        %v1575 = vmul.f32 1.0, %v1574
        %v1576 = vtanh.pop %v1569
        %v1577 = vmul.f32 %v1575, %v1514
        %1579 = vrot.lane.b32.xlu0 %v1576, 64
        %v1580 = vpop.permute.xlu0 %1579
        %v1582 = vmul.f32 %v1575, %v1580
        %1584 = vrot.lane.b32.xlu0 %v1582, 32
        %v1585 = vpop.permute.xlu0 %1584
        %v1587 = vadd.f32 %v1577, %v1585
        %v1588 = vtanh.pop %v1587
        %1590 = vrot.lane.b32.xlu0 %v1588, 64
        %v1591 = vpop.permute.xlu0 %1590
        %v1593 = vmul.f32 %v1575, %v1591
        %v1594 = vld [vmem:[%s1061] sm:$0xff]
        %v1595 = vpack.c.bf16 %v1593, %v1593
        %1597 = vrot.lane.b32.xlu0 %v1595, 32
        %v1598 = vpop.permute.xlu0 %1597
        %v1600 = vsel %vm1083, %v1598, 0
        %1602 = vmatprep.subr.bf16.mxu0 0
        %1603 = vmatpush1.bf16.msra.mxu0 %v1079
        %1604 = vmatprep.subr.bf16.mxu0 0
        %1605 = vmatpush1.bf16.msra.mxu0 %v1080
        %1606 = vmatprep.subr.bf16.mxu0 0
        %1607 = vmatpush1.bf16.msra.mxu0 0
        %1608 = vmatprep.subr.bf16.mxu0 0
        %1609 = vmatpush1.bf16.msra.mxu0 0
        %1610 = vmatprep.subr.bf16.mxu0 0
        %1611 = vmatpush1.bf16.msra.mxu0 0
        %1612 = vmatprep.subr.bf16.mxu0 0
        %1613 = vmatpush1.bf16.msra.mxu0 0
        %1614 = vmatprep.subr.bf16.mxu0 0
        %1615 = vmatpush1.bf16.msra.mxu0 0
        %1616 = vmatprep.subr.bf16.mxu0 0
        %1617 = vmatpush1.bf16.msra.mxu0 0
        %1618 = vmatprep.subr.bf16.mxu0 0
        %1619 = vmatpush1.bf16.msra.mxu0 0
        %1620 = vmatprep.subr.bf16.mxu0 0
        %1621 = vmatpush1.bf16.msra.mxu0 0
        %1622 = vmatprep.subr.bf16.mxu0 0
        %1623 = vmatpush1.bf16.msra.mxu0 0
        %1624 = vmatprep.subr.bf16.mxu0 0
        %1625 = vmatpush1.bf16.msra.mxu0 0
        %1626 = vmatprep.subr.bf16.mxu0 0
        %1627 = vmatpush1.bf16.msra.mxu0 0
        %1628 = vmatprep.subr.bf16.mxu0 0
        %1629 = vmatpush1.bf16.msra.mxu0 0
        %1630 = vmatprep.subr.bf16.mxu0 0
        %1631 = vmatpush1.bf16.msra.mxu0 0
        %1632 = vmatprep.subr.bf16.mxu0 0
        %1633 = vmatpush1.bf16.msra.mxu0 0
        %1634 = vmatprep.mubr.bf16.mxu0 0
        %1635 = vmatmul.mubr.bf16.gmra.mrb[0].mxu0 %v1600
        %v1636 = vpop.f32.mrb[0].mxu0
        %v1637 = vadd.f32 0.0, %v1636
        %v1638 = vpop.f32.mrb[0].mxu0
        %v1639 = vpop.f32.mrb[0].mxu0
        %v1640 = vpop.f32.mrb[0].mxu0
        %1641 = vdwg.mxu0
        %v1642 = vadd.f32 %v1594, %v1637
        %v1643 = vxor.u32 %v1642, 2147483648
        %v1644 = vmul.f32 %v1643, 1.442695
        %v1645 = vpow.pop %v1644
        %v1646 = vadd.f32 %v1645, 1.0
        %v1647 = vrcp.pop %v1646
        %v1648 = vmul.f32 1.0, %v1647
        %v1649 = vtanh.pop %v1642
        %v1650 = vmul.f32 %v1648, %v1587
        %1652 = vrot.lane.b32.xlu0 %v1649, 64
        %v1653 = vpop.permute.xlu0 %1652
        %v1655 = vmul.f32 %v1648, %v1653
        %1657 = vrot.lane.b32.xlu0 %v1655, 32
        %v1658 = vpop.permute.xlu0 %1657
        %v1660 = vadd.f32 %v1650, %v1658
        %v1661 = vtanh.pop %v1660
        %1663 = vrot.lane.b32.xlu0 %v1661, 64
        %v1664 = vpop.permute.xlu0 %1663
        %v1666 = vmul.f32 %v1648, %v1664
        %1668 = vrot.lane.b32.xlu0 %v1666, 32
        %v1669 = vpop.permute.xlu0 %1668
        %1671 = vst.msk [vmem:[#allocation3] sm:$0xff] %vm1083, %v1669
        %1673 = vrot.lane.b32.xlu0 %v1660, 96
        %v1674 = vpop.permute.xlu0 %1673
        %1676 = vst.msk [vmem:[#allocation4] sm:$0xff] %vm1083, %v1674
        %p1677 = scmp.eq.s32.totalorder %s18, 1
        // Predicated region
        $region87: #{tpu_custom_call.1} parent=77 // pred_check
          %p1678 = pneg %p1677
        $region88: #{tpu_custom_call.1} parent=77 // pred_check_branch
          %1680 = sbr.rel (%p1678) target = $region90
        $region89: #{tpu_custom_call.1} parent=77 // pred_region
          %v1681 = vpack.c.bf16 %v1666, %v1666
          %v1682 = vld [vmem:[%s4] sm:$0xf]
          %v1683 = vld [vmem:[%s4 + $0x4] sm:$0xf]
          %v1684 = vld [vmem:[%s4 + $0x8] sm:$0xf]
          %v1685 = vld [vmem:[%s4 + $0xc] sm:$0xf]
          %v1686 = vld [vmem:[%s5] sm:$0x1]
          %v1688 = vlaneseq
          %v1689 = vshrl.u32 %v1688, 7
          %v1690 = vsub.s32 0, %v1689
          %v1691 = vrot.slane %v1686, %v1690
          %1694 = vrot.lane.b32.xlu0 %v1681, 32
          %v1695 = vpop.permute.xlu0 %1694
          %v1700 = vunpack.c.l.b16 %v1682
          %v1701 = vunpack.c.l.b16 %v1683
          %v1702 = vunpack.c.l.b16 %v1684
          %v1703 = vunpack.c.l.b16 %v1685
          %v1704 = vpack.c.b16 %v1701, %v1700
          %v1705 = vpack.c.b16 %v1703, %v1702
          %v1709 = vsel %vm1083, %v1695, 0
          %1711 = vmatprep.subr.bf16.mxu0 0
          %1712 = vmatpush1.bf16.msra.mxu0 %v1704
          %1713 = vmatprep.subr.bf16.mxu0 0
          %1714 = vmatpush1.bf16.msra.mxu0 %v1705
          %1715 = vmatprep.subr.bf16.mxu0 0
          %1716 = vmatpush1.bf16.msra.mxu0 0
          %1717 = vmatprep.subr.bf16.mxu0 0
          %1718 = vmatpush1.bf16.msra.mxu0 0
          %1719 = vmatprep.subr.bf16.mxu0 0
          %1720 = vmatpush1.bf16.msra.mxu0 0
          %1721 = vmatprep.subr.bf16.mxu0 0
          %1722 = vmatpush1.bf16.msra.mxu0 0
          %1723 = vmatprep.subr.bf16.mxu0 0
          %1724 = vmatpush1.bf16.msra.mxu0 0
          %1725 = vmatprep.subr.bf16.mxu0 0
          %1726 = vmatpush1.bf16.msra.mxu0 0
          %1727 = vmatprep.subr.bf16.mxu0 0
          %1728 = vmatpush1.bf16.msra.mxu0 0
          %1729 = vmatprep.subr.bf16.mxu0 0
          %1730 = vmatpush1.bf16.msra.mxu0 0
          %1731 = vmatprep.subr.bf16.mxu0 0
          %1732 = vmatpush1.bf16.msra.mxu0 0
          %1733 = vmatprep.subr.bf16.mxu0 0
          %1734 = vmatpush1.bf16.msra.mxu0 0
          %1735 = vmatprep.subr.bf16.mxu0 0
          %1736 = vmatpush1.bf16.msra.mxu0 0
          %1737 = vmatprep.subr.bf16.mxu0 0
          %1738 = vmatpush1.bf16.msra.mxu0 0
          %1739 = vmatprep.subr.bf16.mxu0 0
          %1740 = vmatpush1.bf16.msra.mxu0 0
          %1741 = vmatprep.subr.bf16.mxu0 0
          %1742 = vmatpush1.bf16.msra.mxu0 0
          %1743 = vmatprep.mubr.bf16.mxu0 0
          %1744 = vmatmul.mubr.bf16.gmra.mrb[0].mxu0 %v1709
          %v1745 = vpop.f32.mrb[0].mxu0
          %v1746 = vadd.f32 %v1691, %v1745
          %v1747 = vpop.f32.mrb[0].mxu0
          %v1748 = vpop.f32.mrb[0].mxu0
          %v1749 = vpop.f32.mrb[0].mxu0
          %1750 = vdwg.mxu0
          %1751 = vst [vmem:[#allocation6] sm:$0xff] %v1746
        $region90: #{tpu_custom_call.1} parent=77 // pred_fallthru
          _
        // Predicated region
        $region91: #{tpu_custom_call.1} parent=77 // pred_check
          %p1752 = pneg %p162
        $region92: #{tpu_custom_call.1} parent=77 // pred_check_branch
          %1754 = sbr.rel (%p1752) target = $region94
        $region93: #{tpu_custom_call.1} parent=77 // pred_region
          %s1756 = ssub.s32 128, 128
          %1757 = vsyncadd [#allocation7], %s1756
          %s1759 = sshll.u32 [#allocation6], 4
          %s1760 = int_to_ptr.vmem [resolvable:$true] %s1759
          %1762 = dma.vmem_to_hbm [thread:$0]  %s1760, 128, %s6, [#allocation7]
        $region94: #{tpu_custom_call.1} parent=77 // pred_fallthru
          _
        // Predicated region
        $region95: #{tpu_custom_call.1} parent=77 // pred_check
          %p1763 = pneg %p162
        $region96: #{tpu_custom_call.1} parent=77 // pred_check_branch
          %1765 = sbr.rel (%p1763) target = $region98
        $region97: #{tpu_custom_call.1} parent=77 // pred_region
          %1766 = dma.done [#allocation7], 128
        $region98: #{tpu_custom_call.1} parent=77 // pred_fallthru
          _
      $region78: #{tpu_custom_call.1} parent=5 // pred_fallthru
        _
      %p1767 = scmp.le.s32.totalorder 2, %s13
      // Predicated region
      $region99: #{tpu_custom_call.1} parent=5 // pred_check
        %p1768 = pneg %p1767
      $region100: #{tpu_custom_call.1} parent=5 // pred_check_branch
        %1770 = sbr.rel (%p1768) target = $region102
      $region101: #{tpu_custom_call.1} parent=5 // pred_region
        %s1771 = ssub.s32 %s13, 2
      $region102: #{tpu_custom_call.1} parent=5 // pred_fallthru
        _
    $region6: #{tpu_custom_call.1} parent=1 // loop_footer
      %s17 = sadd.s32 1, %s13
    $region7: #{tpu_custom_call.1} parent=1 // loop_footer_branch
      %12 = sbr.rel target = $region3
    $region8: #{tpu_custom_call.1} parent=1 // loop_exit
      _
    %1772 = vsyncpa [#allocation7], 1
    %s1773 = scalar_lea.sflag [#allocation7], 1
    %1774 = vsyncpa %s1773, 1

</llo_original>
